<compile_context>
chip_gen: v7x
topology: tpu7x:2x2x1
jax: 0.10.0
libtpu: 0.0.40
codegen_flags: <defaults>
</compile_context>

<pallas_src>
import jax
import jax.numpy as jnp
import numpy as np
from jax.experimental import pallas as pl
from jax.experimental.pallas import tpu as pltpu

BN_EPS = 1e-5
LANE = 128


def _vmem_limit_bytes():
    """Generation-aware scoped-VMEM limit (leave headroom for compiler scratch)."""
    try:
        cap = int(pltpu.get_tpu_info().vmem_capacity_bytes)
    except Exception:
        cap = 0
    if cap <= 0:
        return 48 * 1024 * 1024                       # safe everywhere (v7x: 64 MiB/TC)
    return int(min(max(cap - 16 * 1024 * 1024, 32 * 1024 * 1024), 112 * 1024 * 1024))


def _pick_row_tile(H, W, n_batch, step_bytes_fn, budget, *, even=False, min_steps=4):
    """Largest row tile TH dividing H whose double-buffered working set fits `budget`
    while still exposing >= min_steps grid steps (pipelining / v7x 2-TC split)."""
    cands = [d for d in range(1, H + 1)
             if H % d == 0
             and (not even or d % 2 == 0)
             and ((d * W) % 8 == 0 or d == H)]        # keep (8,128)-friendly blocks
    if not cands:
        return H
    cands.sort(reverse=True)
    fitting = [d for d in cands if step_bytes_fn(d) <= budget] or [cands[-1]]
    for d in fitting:                                 # descending: largest tile first
        if n_batch * (H // d) >= min_steps:
            return d
    return fitting[-1]


# ---------------------------------------------------------------------------
# Pass 1: conv (MXU) + per-tile sum / sum-of-squares
# ---------------------------------------------------------------------------
def _make_conv_stats_kernel(TH, W, KK, fuse):
    THW = TH * W

    def kernel(xh_ref, w_ref, y_ref, ps_ref):
        # xh_ref: (1, 1, (TH+2)*W, KK) bf16   halo'd horizontal-tap stack for this tile
        # w_ref : (3*KK, CP) bf16 if fuse else (3, KK, CP) bf16
        # y_ref : (1, TH*W, CP) bf16          conv output (bias dropped: cancelled by BN)
        # ps_ref: (1, 1, 2, CP) f32           per-tile (sum, sum-of-squares)
        xv = xh_ref[0, 0]                                       # ((TH+2)*W, KK)
        if fuse:
            # One K=3*KK MXU dot instead of three K=KK dots (channel-light layers).
            # The concat goes through f32 (unaligned lane concat of packed bf16 is less
            # well supported); the round-trip cast preserves values exactly.
            taps = [xv[ky * W: ky * W + THW].astype(jnp.float32) for ky in range(3)]
            xcat = jnp.concatenate(taps, axis=-1).astype(jnp.bfloat16)
            acc = jnp.dot(xcat, w_ref[...], preferred_element_type=jnp.float32)
        else:
            wv = w_ref[...]                                     # (3, KK, CP)
            acc = jnp.dot(xv[0:THW], wv[0], preferred_element_type=jnp.float32)
            acc = acc + jnp.dot(xv[W:W + THW], wv[1],
                                preferred_element_type=jnp.float32)
            acc = acc + jnp.dot(xv[2 * W:2 * W + THW], wv[2],
                                preferred_element_type=jnp.float32)
        y_ref[0] = acc.astype(y_ref.dtype)
        # two direct row stores (no small concat copy)
        ps_ref[0, 0, 0:1, :] = jnp.sum(acc, axis=0, keepdims=True)
        ps_ref[0, 0, 1:2, :] = jnp.sum(acc * acc, axis=0, keepdims=True)

    return kernel


# ---------------------------------------------------------------------------
# Pass 2a: BN scale/shift + ReLU (no pool), row-tiled lane-dense slabs
# ---------------------------------------------------------------------------
def _bn_relu_kernel(y_ref, sc_ref, sh_ref, o_ref):
    y = y_ref[...].astype(jnp.float32)           # f32 VALU (v5e has no bf16 VPU)
    o_ref[...] = jnp.maximum(y * sc_ref[...] + sh_ref[...], 0.0).astype(o_ref.dtype)


# ---------------------------------------------------------------------------
# Pass 2b: BN scale/shift + ReLU + fused 2x2 max-pool.  Adjacent W pairs live in
# the lane dim (2*CP lanes), so the W max is a full-vreg VPU max between the
# [0:CP] and [CP:2CP] lane slabs; the H max is a free leading-dim reshape + max.
# ---------------------------------------------------------------------------
def _bn_relu_pool_kernel(y_ref, sc_ref, sh_ref, o_ref):
    _, TH, Wh, C2 = y_ref.shape
    C = C2 // 2
    y = y_ref[...].astype(jnp.float32)
    y = jnp.maximum(y * sc_ref[...] + sh_ref[...], 0.0)        # (1, TH, W/2, 2C)
    y = jnp.maximum(y[..., :C], y[..., C:])                    # W-pair max
    y = jnp.max(y.reshape(TH // 2, 2, Wh, C), axis=1)          # H-pair max
    o_ref[...] = y.reshape(1, TH // 2, Wh, C).astype(o_ref.dtype)


def conv_bn(x_nchw, weight, bias, gamma, beta, *, pool=False):
    """Forward of ConvBn (kernel 3, stride 1, padding 1), training-mode BatchNorm.

    `bias` is accepted for API parity but never read: a conv bias is cancelled exactly
    by the training-mode BN mean subtraction (the f32 reference keeps it)."""
    # TODO(synk): BatchNorm running_mean/running_var momentum buffer updates are not
    # modeled; only the forward activations are produced.
    del bias
    N, Cin, H, W = map(int, x_nchw.shape)
    Cout, _, KH, KW = map(int, weight.shape)
    assert (KH, KW) == (3, 3)
    if pool:
        assert H % 2 == 0 and W % 2 == 0
    HW = H * W
    KK = KW * Cin                                     # per-vertical-tap K
    CP = ((Cout + LANE - 1) // LANE) * LANE           # lane-dense padded channel dim
    # TODO(synk): for Cout >> 128 on v6e/v7x add a Cout-tile grid axis with 256-lane
    # output blocks; for Cout << 128 consider packing W/N into lanes instead of padding.

    vmem_limit = _vmem_limit_bytes()
    budget = vmem_limit // 2                          # per-step working set budget
    cparams = pltpu.CompilerParams(
        dimension_semantics=("parallel", "parallel"), # v7x: both axes TC-splittable
        vmem_limit_bytes=vmem_limit)

    # ---- row tile for pass 1 (double-buffered bf16 in/out + f32 partial sums) ----
    def p1_bytes(d):
        return 2 * ((d + 2) * W * KK * 2 + d * W * CP * 2 + 2 * CP * 4)
    TH1 = _pick_row_tile(H, W, N, p1_bytes, budget)
    nt1 = H // TH1

    # ---- glue: NCHW -> NHWC bf16, pad spatial, build halo'd row tiles with the three
    # horizontal taps stacked on channels:
    #   xt[n, t, r*W + w, kx*Cin + c] = x_pad[n, t*TH1 + r, w + kx, c]
    x = jnp.transpose(x_nchw, (0, 2, 3, 1)).astype(jnp.bfloat16)
    xpad = jnp.pad(x, ((0, 0), (1, 1), (1, 1), (0, 0)))
    xt = jnp.concatenate(
        [jnp.stack([xpad[:, t * TH1: t * TH1 + TH1 + 2, kx:kx + W, :]
                    for t in range(nt1)], axis=1)
         for kx in range(KW)], axis=-1)
    xt = xt.reshape(N, nt1, (TH1 + 2) * W, KK)
    # TODO(synk): the horizontal-tap stack still inflates activation HBM ~3x; for large
    # Cin feed the padded (H+2, W+2, Cin) input directly with 9 accumulated K=Cin taps.

    # weights: (Cout, Cin, ky, kx) -> (ky, kx*Cin + cin, Cout), zero-padded to CP lanes
    w_t3 = jnp.transpose(weight, (2, 3, 1, 0)).reshape(KH, KK, Cout)
    w_t3 = jnp.pad(w_t3, ((0, 0), (0, 0), (0, CP - Cout))).astype(jnp.bfloat16)
    w9 = w_t3.reshape(KH * KK, CP)                    # fused-K weight layout

    # ---- pass 1: conv + per-tile (sum, sumsq), pipelined over (image, row tile) ----
    # TODO(synk): sweep pipeline_mode=pl.Buffered(3) on the xt spec if the per-step DMA
    # becomes exposed after the bf16 / K-fusion shrink of per-step compute.
    def run_pass1(fuse):
        w_in = w9 if fuse else w_t3
        w_spec = (pl.BlockSpec((KH * KK, CP), lambda n, t: (0, 0)) if fuse
                  else pl.BlockSpec((KH, KK, CP), lambda n, t: (0, 0, 0)))
        return pl.pallas_call(
            _make_conv_stats_kernel(TH1, W, KK, fuse),
            grid=(N, nt1),
            out_shape=(jax.ShapeDtypeStruct((N, HW, CP), jnp.bfloat16),
                       jax.ShapeDtypeStruct((N, nt1, 2, CP), jnp.float32)),
            in_specs=[pl.BlockSpec((1, 1, (TH1 + 2) * W, KK),
                                   lambda n, t: (n, t, 0, 0)),
                      w_spec],
            out_specs=(pl.BlockSpec((1, TH1 * W, CP), lambda n, t: (n, t, 0)),
                       pl.BlockSpec((1, 1, 2, CP), lambda n, t: (n, t, 0, 0))),
            compiler_params=cparams,
        )(xt, w_in)

    if 3 * KK <= 128:                                 # fused K still fits one MXU pass
        try:
            y_flat, psums = run_pass1(True)
        except Exception:                             # unaligned lane concat not lowered
            y_flat, psums = run_pass1(False)
    else:
        y_flat, psums = run_pass1(False)

    # ---- glue finalize (O(Cout)): fold batch stats + affine into scale/shift ----
    # TODO(synk): E[x^2]-E[x]^2 in f32 can lose precision for very large N*H*W; switch
    # to per-tile centered stats + combine if tolerances ever require it.
    R = float(N * HW)
    stats = jnp.sum(psums, axis=(0, 1))               # (2, CP) f32
    mean = stats[0] / R
    var = jnp.maximum(stats[1] / R - mean * mean, 0.0)  # biased var (PyTorch training)
    g = jnp.pad(gamma.astype(jnp.float32), (0, CP - Cout))
    b = jnp.pad(beta.astype(jnp.float32), (0, CP - Cout))
    scale = g * jax.lax.rsqrt(var + BN_EPS)
    shift = b - mean * scale

    # ---- pass 2: scale/shift + ReLU (+ fused 2x2 max-pool), row-tiled ----
    if pool:
        def p2_bytes(d):
            return 2 * (d * W * CP * 2 + (d // 2) * (W // 2) * CP * 4 + 4 * CP * 4)
        TH2 = _pick_row_tile(H, W, N, p2_bytes, budget, even=True)
        y4 = y_flat.reshape(N, H, W // 2, 2 * CP)     # free metadata reshape
        sc2 = jnp.concatenate([scale, scale]).reshape(1, 1, 1, 2 * CP)
        sh2 = jnp.concatenate([shift, shift]).reshape(1, 1, 1, 2 * CP)
        out = pl.pallas_call(
            _bn_relu_pool_kernel,
            grid=(N, H // TH2),
            out_shape=jax.ShapeDtypeStruct((N, H // 2, W // 2, CP), jnp.float32),
            in_specs=[pl.BlockSpec((1, TH2, W // 2, 2 * CP),
                                   lambda n, t: (n, t, 0, 0)),
                      pl.BlockSpec((1, 1, 1, 2 * CP), lambda n, t: (0, 0, 0, 0)),
                      pl.BlockSpec((1, 1, 1, 2 * CP), lambda n, t: (0, 0, 0, 0))],
            out_specs=pl.BlockSpec((1, TH2 // 2, W // 2, CP),
                                   lambda n, t: (n, t, 0, 0)),
            compiler_params=cparams,
        )(y4, sc2, sh2)
        out = out[..., :Cout]                         # drop channel padding
    else:
        def p2_bytes(d):
            return 2 * (d * W * CP * 2 + d * W * CP * 4 + 2 * CP * 4)
        TH2 = _pick_row_tile(H, W, N, p2_bytes, budget)
        out = pl.pallas_call(
            _bn_relu_kernel,
            grid=(N, H // TH2),
            out_shape=jax.ShapeDtypeStruct((N, HW, CP), jnp.float32),
            in_specs=[pl.BlockSpec((1, TH2 * W, CP), lambda n, t: (n, t, 0)),
                      pl.BlockSpec((1, 1, CP), lambda n, t: (0, 0, 0)),
                      pl.BlockSpec((1, 1, CP), lambda n, t: (0, 0, 0))],
            out_specs=pl.BlockSpec((1, TH2 * W, CP), lambda n, t: (n, t, 0)),
            compiler_params=cparams,
        )(y_flat, scale.reshape(1, 1, CP), shift.reshape(1, 1, CP))
        out = out.reshape(N, H, W, CP)[..., :Cout]

    # TODO(synk): if the consumer accepts NHWC, drop this transpose (extra HBM pass).
    return jnp.transpose(out, (0, 3, 1, 2))           # NHWC -> NCHW


def _reference(x, weight, bias, gamma, beta, pool):
    y = jax.lax.conv_general_dilated(
        x, weight, window_strides=(1, 1), padding=((1, 1), (1, 1)),
        dimension_numbers=("NCHW", "OIHW", "NCHW"))
    y = y + bias[None, :, None, None]
    mean = jnp.mean(y, axis=(0, 2, 3), keepdims=True)
    var = jnp.mean((y - mean) ** 2, axis=(0, 2, 3), keepdims=True)
    y = (y - mean) * jax.lax.rsqrt(var + BN_EPS) * gamma[None, :, None, None] \
        + beta[None, :, None, None]
    y = jnp.maximum(y, 0.0)
    if pool:
        n, c, h, w = y.shape
        y = y.reshape(n, c, h // 2, 2, w // 2, 2).max(axis=(3, 5))
    return y


if __name__ == "__main__":
    def run_case(N, Cin, H, W, Cout, pool, key):
        k1, k2, k3 = jax.random.split(key, 3)
        x = jax.random.normal(k1, (N, Cin, H, W), dtype=jnp.float32)
        weight = 0.1 * jax.random.normal(k2, (Cout, Cin, 3, 3), dtype=jnp.float32)
        bias = 0.1 * jax.random.normal(k3, (Cout,), dtype=jnp.float32)
        gamma = 1.0 + 0.1 * jnp.arange(Cout, dtype=jnp.float32)
        beta = 0.05 * jnp.arange(Cout, dtype=jnp.float32)
        out = jax.block_until_ready(conv_bn(x, weight, bias, gamma, beta, pool=pool))
        ref = _reference(x, weight, bias, gamma, beta, pool)
        assert out.shape == ref.shape, (out.shape, ref.shape)
        # bf16 activation/weight storage -> loosened tolerances (accumulation is f32)
        np.testing.assert_allclose(np.asarray(out), np.asarray(ref),
                                   rtol=5e-2, atol=5e-2)

    key = jax.random.PRNGKey(0)
    k0, k1, k2 = jax.random.split(key, 3)
    # fused-K path (9*Cin <= 128), with and without the fused 2x2 max-pool
    run_case(2, 4, 16, 16, 8, True, k0)
    run_case(2, 4, 16, 16, 8, False, k1)
    # accumulated-3-tap path (9*Cin > 128), wider channels
    run_case(1, 48, 16, 16, 16, False, k2)

    print("KERNEL_OK")
</pallas_src>

<mosaic_0001>
module attributes {stable_mosaic.version = 11 : i64} {
  func.func @kernel(%arg0: i32, %arg1: i32, %arg2: memref<1x1x160x12xbf16, #tpu.memory_space<vmem>>, %arg3: memref<36x128xbf16, #tpu.memory_space<vmem>>, %arg4: memref<1x128x128xbf16, #tpu.memory_space<vmem>>, %arg5: memref<1x1x2x128xf32, #tpu.memory_space<vmem>>) attributes {dimension_semantics = [#tpu.dimension_semantics<parallel>, #tpu.dimension_semantics<parallel>], iteration_bounds = array<i64: 2, 2>, scalar_prefetch = 0 : i64, scratch_operands = 0 : i64, tpu.core_type = #tpu.core_type<tc>, window_params = [{transform_indices = @transform_0, window_bounds = array<i64: 1, 1, 160, 12>}, {pipeline_mode = #tpu.pipeline_mode<synchronous>, transform_indices = @transform_1, window_bounds = array<i64: 36, 128>}, {transform_indices = @transform_2, window_bounds = array<i64: 1, 128, 128>}, {transform_indices = @transform_3, window_bounds = array<i64: 1, 1, 2, 128>}]} {
    %c0 = arith.constant 0 : index
    %c0_0 = arith.constant 0 : index
    %c0_1 = arith.constant 0 : index
    %c0_2 = arith.constant 0 : index
    %0 = vector.load %arg2[%c0, %c0_0, %c0_1, %c0_2] : memref<1x1x160x12xbf16, #tpu.memory_space<vmem>>, vector<1x1x160x12xbf16>
    %1 = vector.shape_cast %0 : vector<1x1x160x12xbf16> to vector<160x12xbf16>
    %2 = vector.extract_strided_slice %1 {offsets = [0, 0], sizes = [128, 12], strides = [1, 1]} : vector<160x12xbf16> to vector<128x12xbf16>
    %3 = arith.extf %2 : vector<128x12xbf16> to vector<128x12xf32>
    %4 = vector.extract_strided_slice %1 {offsets = [16, 0], sizes = [128, 12], strides = [1, 1]} : vector<160x12xbf16> to vector<128x12xbf16>
    %5 = arith.extf %4 : vector<128x12xbf16> to vector<128x12xf32>
    %6 = vector.extract_strided_slice %1 {offsets = [32, 0], sizes = [128, 12], strides = [1, 1]} : vector<160x12xbf16> to vector<128x12xbf16>
    %7 = arith.extf %6 : vector<128x12xbf16> to vector<128x12xf32>
    %8 = tpu.concatenate %3, %5, %7 in 1 : vector<128x12xf32>, vector<128x12xf32>, vector<128x12xf32> -> vector<128x36xf32>
    %9 = arith.truncf %8 : vector<128x36xf32> to vector<128x36xbf16>
    %c0_3 = arith.constant 0 : index
    %c0_4 = arith.constant 0 : index
    %10 = vector.load %arg3[%c0_3, %c0_4] : memref<36x128xbf16, #tpu.memory_space<vmem>>, vector<36x128xbf16>
    %cst = arith.constant dense<0.000000e+00> : vector<128x128xf32>
    %11 = tpu.matmul %9, %10, %cst {dimension_numbers = #tpu.dot_dimension_numbers<[1], [0], [0], [1], [0, 0, 1, 1], [], []>} : vector<128x36xbf16>, vector<36x128xbf16>, vector<128x128xf32> -> vector<128x128xf32>
    %12 = arith.truncf %11 : vector<128x128xf32> to vector<128x128xbf16>
    %c0_5 = arith.constant 0 : index
    %c0_6 = arith.constant 0 : index
    %c0_7 = arith.constant 0 : index
    %13 = vector.load %arg4[%c0_5, %c0_6, %c0_7] : memref<1x128x128xbf16, #tpu.memory_space<vmem>>, vector<1x128x128xbf16>
    %14 = vector.shape_cast %13 : vector<1x128x128xbf16> to vector<128x128xbf16>
    %15 = vector.shape_cast %12 : vector<128x128xbf16> to vector<1x128x128xbf16>
    tpu.vector_store %arg4[%c0_5, %c0_6, %c0_7], %15 {strides = array<i32>} : memref<1x128x128xbf16, #tpu.memory_space<vmem>>, vector<1x128x128xbf16>,
    %cst_8 = arith.constant dense<0.000000e+00> : vector<128xf32>
    %16 = vector.multi_reduction <add>, %11, %cst_8 [0] : vector<128x128xf32> to vector<128xf32>
    %17 = vector.shape_cast %16 : vector<128xf32> to vector<1x128xf32>
    %c0_9 = arith.constant 0 : index
    %c0_10 = arith.constant 0 : index
    %c0_11 = arith.constant 0 : index
    %c0_12 = arith.constant 0 : index
    %18 = vector.load %arg5[%c0_9, %c0_10, %c0_11, %c0_12] : memref<1x1x2x128xf32, #tpu.memory_space<vmem>>, vector<1x1x1x128xf32>
    %19 = vector.shape_cast %18 : vector<1x1x1x128xf32> to vector<1x128xf32>
    %20 = vector.shape_cast %17 : vector<1x128xf32> to vector<1x1x1x128xf32>
    tpu.vector_store %arg5[%c0_9, %c0_10, %c0_11, %c0_12], %20 {strides = array<i32>} : memref<1x1x2x128xf32, #tpu.memory_space<vmem>>, vector<1x1x1x128xf32>,
    %21 = arith.mulf %11, %11 : vector<128x128xf32>
    %cst_13 = arith.constant dense<0.000000e+00> : vector<128xf32>
    %22 = vector.multi_reduction <add>, %21, %cst_13 [0] : vector<128x128xf32> to vector<128xf32>
    %23 = vector.shape_cast %22 : vector<128xf32> to vector<1x128xf32>
    %c0_14 = arith.constant 0 : index
    %c0_15 = arith.constant 0 : index
    %c1 = arith.constant 1 : index
    %c0_16 = arith.constant 0 : index
    %24 = vector.load %arg5[%c0_14, %c0_15, %c1, %c0_16] : memref<1x1x2x128xf32, #tpu.memory_space<vmem>>, vector<1x1x1x128xf32>
    %25 = vector.shape_cast %24 : vector<1x1x1x128xf32> to vector<1x128xf32>
    %26 = vector.shape_cast %23 : vector<1x128xf32> to vector<1x1x1x128xf32>
    tpu.vector_store %arg5[%c0_14, %c0_15, %c1, %c0_16], %26 {strides = array<i32>} : memref<1x1x2x128xf32, #tpu.memory_space<vmem>>, vector<1x1x1x128xf32>,
    return
  }
  func.func @transform_0(%arg0: i32, %arg1: i32) -> (i32, i32, i32, i32) {
    %c0_i32 = arith.constant 0 : i32
    %c0_i32_0 = arith.constant 0 : i32
    %c0_i32_1 = arith.constant 0 : i32
    return %arg0, %arg1, %c0_i32, %c0_i32_0 : i32, i32, i32, i32
  }
  func.func @transform_1(%arg0: i32, %arg1: i32) -> (i32, i32) {
    %c0_i32 = arith.constant 0 : i32
    %c0_i32_0 = arith.constant 0 : i32
    %c0_i32_1 = arith.constant 0 : i32
    return %c0_i32, %c0_i32_0 : i32, i32
  }
  func.func @transform_2(%arg0: i32, %arg1: i32) -> (i32, i32, i32) {
    %c0_i32 = arith.constant 0 : i32
    %c0_i32_0 = arith.constant 0 : i32
    return %arg0, %arg1, %c0_i32 : i32, i32, i32
  }
  func.func @transform_3(%arg0: i32, %arg1: i32) -> (i32, i32, i32, i32) {
    %c0_i32 = arith.constant 0 : i32
    %c0_i32_0 = arith.constant 0 : i32
    %c0_i32_1 = arith.constant 0 : i32
    return %arg0, %arg1, %c0_i32, %c0_i32_0 : i32, i32, i32, i32
  }
}

module attributes {stable_mosaic.version = 11 : i64} {
  func.func @kernel(%arg0: i32, %arg1: i32, %arg2: memref<1x1x160x12xbf16, #tpu.memory_space<vmem>>, %arg3: memref<3x12x128xbf16, #tpu.memory_space<vmem>>, %arg4: memref<1x128x128xbf16, #tpu.memory_space<vmem>>, %arg5: memref<1x1x2x128xf32, #tpu.memory_space<vmem>>) attributes {dimension_semantics = [#tpu.dimension_semantics<parallel>, #tpu.dimension_semantics<parallel>], iteration_bounds = array<i64: 2, 2>, scalar_prefetch = 0 : i64, scratch_operands = 0 : i64, tpu.core_type = #tpu.core_type<tc>, window_params = [{transform_indices = @transform_0, window_bounds = array<i64: 1, 1, 160, 12>}, {pipeline_mode = #tpu.pipeline_mode<synchronous>, transform_indices = @transform_1, window_bounds = array<i64: 3, 12, 128>}, {transform_indices = @transform_2, window_bounds = array<i64: 1, 128, 128>}, {transform_indices = @transform_3, window_bounds = array<i64: 1, 1, 2, 128>}]} {
    %c0 = arith.constant 0 : index
    %c0_0 = arith.constant 0 : index
    %c0_1 = arith.constant 0 : index
    %c0_2 = arith.constant 0 : index
    %0 = vector.load %arg2[%c0, %c0_0, %c0_1, %c0_2] : memref<1x1x160x12xbf16, #tpu.memory_space<vmem>>, vector<1x1x160x12xbf16>
    %1 = vector.shape_cast %0 : vector<1x1x160x12xbf16> to vector<160x12xbf16>
    %c0_3 = arith.constant 0 : index
    %c0_4 = arith.constant 0 : index
    %c0_5 = arith.constant 0 : index
    %2 = vector.load %arg3[%c0_3, %c0_4, %c0_5] : memref<3x12x128xbf16, #tpu.memory_space<vmem>>, vector<3x12x128xbf16>
    %3 = vector.extract_strided_slice %1 {offsets = [0, 0], sizes = [128, 12], strides = [1, 1]} : vector<160x12xbf16> to vector<128x12xbf16>
    %4 = vector.extract_strided_slice %2 {offsets = [0, 0, 0], sizes = [1, 12, 128], strides = [1, 1, 1]} : vector<3x12x128xbf16> to vector<1x12x128xbf16>
    %5 = vector.shape_cast %4 : vector<1x12x128xbf16> to vector<12x128xbf16>
    %cst = arith.constant dense<0.000000e+00> : vector<128x128xf32>
    %6 = tpu.matmul %3, %5, %cst {dimension_numbers = #tpu.dot_dimension_numbers<[1], [0], [0], [1], [0, 0, 1, 1], [], []>} : vector<128x12xbf16>, vector<12x128xbf16>, vector<128x128xf32> -> vector<128x128xf32>
    %7 = vector.extract_strided_slice %1 {offsets = [16, 0], sizes = [128, 12], strides = [1, 1]} : vector<160x12xbf16> to vector<128x12xbf16>
    %8 = vector.extract_strided_slice %2 {offsets = [1, 0, 0], sizes = [1, 12, 128], strides = [1, 1, 1]} : vector<3x12x128xbf16> to vector<1x12x128xbf16>
    %9 = vector.shape_cast %8 : vector<1x12x128xbf16> to vector<12x128xbf16>
    %cst_6 = arith.constant dense<0.000000e+00> : vector<128x128xf32>
    %10 = tpu.matmul %7, %9, %cst_6 {dimension_numbers = #tpu.dot_dimension_numbers<[1], [0], [0], [1], [0, 0, 1, 1], [], []>} : vector<128x12xbf16>, vector<12x128xbf16>, vector<128x128xf32> -> vector<128x128xf32>
    %11 = arith.addf %6, %10 : vector<128x128xf32>
    %12 = vector.extract_strided_slice %1 {offsets = [32, 0], sizes = [128, 12], strides = [1, 1]} : vector<160x12xbf16> to vector<128x12xbf16>
    %13 = vector.extract_strided_slice %2 {offsets = [2, 0, 0], sizes = [1, 12, 128], strides = [1, 1, 1]} : vector<3x12x128xbf16> to vector<1x12x128xbf16>
    %14 = vector.shape_cast %13 : vector<1x12x128xbf16> to vector<12x128xbf16>
    %cst_7 = arith.constant dense<0.000000e+00> : vector<128x128xf32>
    %15 = tpu.matmul %12, %14, %cst_7 {dimension_numbers = #tpu.dot_dimension_numbers<[1], [0], [0], [1], [0, 0, 1, 1], [], []>} : vector<128x12xbf16>, vector<12x128xbf16>, vector<128x128xf32> -> vector<128x128xf32>
    %16 = arith.addf %11, %15 : vector<128x128xf32>
    %17 = arith.truncf %16 : vector<128x128xf32> to vector<128x128xbf16>
    %c0_8 = arith.constant 0 : index
    %c0_9 = arith.constant 0 : index
    %c0_10 = arith.constant 0 : index
    %18 = vector.load %arg4[%c0_8, %c0_9, %c0_10] : memref<1x128x128xbf16, #tpu.memory_space<vmem>>, vector<1x128x128xbf16>
    %19 = vector.shape_cast %18 : vector<1x128x128xbf16> to vector<128x128xbf16>
    %20 = vector.shape_cast %17 : vector<128x128xbf16> to vector<1x128x128xbf16>
    tpu.vector_store %arg4[%c0_8, %c0_9, %c0_10], %20 {strides = array<i32>} : memref<1x128x128xbf16, #tpu.memory_space<vmem>>, vector<1x128x128xbf16>,
    %cst_11 = arith.constant dense<0.000000e+00> : vector<128xf32>
    %21 = vector.multi_reduction <add>, %16, %cst_11 [0] : vector<128x128xf32> to vector<128xf32>
    %22 = vector.shape_cast %21 : vector<128xf32> to vector<1x128xf32>
    %c0_12 = arith.constant 0 : index
    %c0_13 = arith.constant 0 : index
    %c0_14 = arith.constant 0 : index
    %c0_15 = arith.constant 0 : index
    %23 = vector.load %arg5[%c0_12, %c0_13, %c0_14, %c0_15] : memref<1x1x2x128xf32, #tpu.memory_space<vmem>>, vector<1x1x1x128xf32>
    %24 = vector.shape_cast %23 : vector<1x1x1x128xf32> to vector<1x128xf32>
    %25 = vector.shape_cast %22 : vector<1x128xf32> to vector<1x1x1x128xf32>
    tpu.vector_store %arg5[%c0_12, %c0_13, %c0_14, %c0_15], %25 {strides = array<i32>} : memref<1x1x2x128xf32, #tpu.memory_space<vmem>>, vector<1x1x1x128xf32>,
    %26 = arith.mulf %16, %16 : vector<128x128xf32>
    %cst_16 = arith.constant dense<0.000000e+00> : vector<128xf32>
    %27 = vector.multi_reduction <add>, %26, %cst_16 [0] : vector<128x128xf32> to vector<128xf32>
    %28 = vector.shape_cast %27 : vector<128xf32> to vector<1x128xf32>
    %c0_17 = arith.constant 0 : index
    %c0_18 = arith.constant 0 : index
    %c1 = arith.constant 1 : index
    %c0_19 = arith.constant 0 : index
    %29 = vector.load %arg5[%c0_17, %c0_18, %c1, %c0_19] : memref<1x1x2x128xf32, #tpu.memory_space<vmem>>, vector<1x1x1x128xf32>
    %30 = vector.shape_cast %29 : vector<1x1x1x128xf32> to vector<1x128xf32>
    %31 = vector.shape_cast %28 : vector<1x128xf32> to vector<1x1x1x128xf32>
    tpu.vector_store %arg5[%c0_17, %c0_18, %c1, %c0_19], %31 {strides = array<i32>} : memref<1x1x2x128xf32, #tpu.memory_space<vmem>>, vector<1x1x1x128xf32>,
    return
  }
  func.func @transform_0(%arg0: i32, %arg1: i32) -> (i32, i32, i32, i32) {
    %c0_i32 = arith.constant 0 : i32
    %c0_i32_0 = arith.constant 0 : i32
    %c0_i32_1 = arith.constant 0 : i32
    return %arg0, %arg1, %c0_i32, %c0_i32_0 : i32, i32, i32, i32
  }
  func.func @transform_1(%arg0: i32, %arg1: i32) -> (i32, i32, i32) {
    %c0_i32 = arith.constant 0 : i32
    %c0_i32_0 = arith.constant 0 : i32
    %c0_i32_1 = arith.constant 0 : i32
    %c0_i32_2 = arith.constant 0 : i32
    return %c0_i32, %c0_i32_0, %c0_i32_1 : i32, i32, i32
  }
  func.func @transform_2(%arg0: i32, %arg1: i32) -> (i32, i32, i32) {
    %c0_i32 = arith.constant 0 : i32
    %c0_i32_0 = arith.constant 0 : i32
    return %arg0, %arg1, %c0_i32 : i32, i32, i32
  }
  func.func @transform_3(%arg0: i32, %arg1: i32) -> (i32, i32, i32, i32) {
    %c0_i32 = arith.constant 0 : i32
    %c0_i32_0 = arith.constant 0 : i32
    %c0_i32_1 = arith.constant 0 : i32
    return %arg0, %arg1, %c0_i32, %c0_i32_0 : i32, i32, i32, i32
  }
}

</mosaic_0001>

<llo_original>
// kernel: tpu_custom_call.1
$region0: #{tpu_custom_call.1}
  #allocation0 [shape = 'u32[]', space=smem, size = 0x4, offset = 0x4, fixed_abs, tag = 'smem constant byte address 0x4 - core index']
  #allocation1 [shape = 'u32[144,128]{1,0:T(1,128)}', space=vmem, size = 0x12000, scoped, tag = 'internal scratch']
  %s0 = inlined_call_operand.vmem [shape: bf16[2,2,160,12], index: 0, kind: input, shape index: {}]
  %s1 = inlined_call_operand.vmem [shape: bf16[36,128], index: 1, kind: input, shape index: {}]
  %s2 = inlined_call_operand.hbm [shape: bf16[2,256,128], index: 2, kind: output, shape index: {0}]
  %s3 = inlined_call_operand.hbm [shape: f32[2,2,2,128], index: 3, kind: output, shape index: {1}]
  %4 = xla_tuple %s2, %s3
  %s5 = sld [smem:[#allocation0]]
  $region49: #{tpu_custom_call.1} parent=0
    _
  %s7 = ssub.s32 1, %s5
  %s8 = scalar_select 0, %s7, %s5
  $region1: #{tpu_custom_call.1} parent=0
    #allocation2 [shape = 'u8[65536]{0}', space=vmem, size = 0x10000, scoped, tag = 'output window, operand 0']
    #allocation3 [shape = 's32[2]{0}', space=sflag, size = 0x8, scoped, tag = 'scoped memory for tpu_custom_call.1']
    #allocation4 [shape = 'u8[2048]{0}', space=vmem, size = 0x800, scoped, tag = 'output window, operand 1']
    #allocation5 [shape = 's32[2]{0}', space=sflag, size = 0x8, scoped, tag = 'scoped memory for tpu_custom_call.1']
    %9 = vsyncpa [#allocation3], 0
    %s10 = scalar_lea.sflag [#allocation3], 1
    %11 = vsyncpa %s10, 0
    %12 = vsyncpa [#allocation5], 0
    %s13 = scalar_lea.sflag [#allocation5], 1
    %14 = vsyncpa %s13, 0
    loop: start=0, step=1, limit=6
    $region2: #{tpu_custom_call.1} parent=1 // loop_pre_header
      _
    $region3: #{tpu_custom_call.1} parent=1 // loop_header
      %s16 = sphi 0, %s20
      %p17 = scmp.ge.s32.totalorder %s16, 6
      %s23 = sphi 0, %s35
      %s24 = sphi 0, %s31
      %s25 = sphi 0, %s23
      %s26 = sphi 0, %s24
      %s27 = sphi 0, %s25
      %s28 = sphi 0, %s26
      %s40 = sphi 0, %s42
      %s43 = sphi 0, %s40
      %s44 = sphi 0, %s43
      %s60 = sphi 0, %s44
      %s64 = sphi 0, %s64
      %s66 = sphi 0, %s64
      %s67 = sphi 0, %s66
      %s81 = sphi 0, %s67
      %s89 = sphi 0, %s91
      %s92 = sphi 0, %s89
      %s93 = sphi 0, %s92
      %s109 = sphi 0, %s93
      %s117 = sphi 0, %s119
      %s120 = sphi 0, %s117
      %s121 = sphi 0, %s120
      %s137 = sphi 0, %s121
    $region4: #{tpu_custom_call.1} parent=1 // loop_header_branch
      %19 = sbr.rel (%p17) target = $region8
    $region5: #{tpu_custom_call.1} parent=1 // loop_body
      %s21 = ssub.s32 %s16, 1
      %s22 = ssub.s32 %s16, 2
      %s29 = sadd.s32 1, %s24
      %p30 = scmp.ge.s32.totalorder %s29, 2
      %s31 = scalar_select %p30, 0, %s29
      %s32 = sadd.s32 1, %s23
      %s33 = scalar_select %p30, %s32, %s23
      %p34 = scmp.ge.s32.totalorder %s33, 2
      %s35 = scalar_select %p34, 0, %s33
      %s36 = ssub.s32 %s23, %s35
      %s37 = ssub.s32 %s24, %s31
      %s38 = sor.u32 %s36, %s37
      %p39 = scmp.eq.s32.totalorder %s38, 0
      %s41 = sadd.s32 %s40, 1
      %s42 = scalar_select %p39, %s40, %s41
      %p45 = pneg %p39
      %p46 = scmp.eq.s32.totalorder %s16, 3
      %p47 = por %p45, %p46
      %p48 = scmp.ne.s32.totalorder %s40, %s43
      %p49 = scmp.eq.s32.totalorder %s16, 0
      %p50 = por %p48, %p49
      %p51 = scmp.ne.s32.totalorder %s40, %s43
      %p52 = scmp.eq.s32.totalorder %s21, 3
      %p53 = por %p51, %p52
      %p54 = scmp.ne.s32.totalorder %s43, %s44
      %p55 = scmp.eq.s32.totalorder %s21, 0
      %p56 = por %p54, %p55
      %p57 = scmp.ne.s32.totalorder %s43, %s44
      %p58 = scmp.eq.s32.totalorder %s22, 3
      %p59 = por %p57, %p58
      %p61 = scmp.ne.s32.totalorder %s44, %s60
      %p62 = scmp.eq.s32.totalorder %s22, 0
      %p63 = por %p61, %p62
      %s65 = sadd.s32 %s64, 1
      %p68 = scmp.eq.s32.totalorder %s16, 3
      %p69 = scmp.ne.s32.totalorder %s64, %s66
      %p70 = scmp.eq.s32.totalorder %s16, 0
      %p71 = por %p69, %p70
      %p72 = scmp.ne.s32.totalorder %s64, %s66
      %p73 = scmp.eq.s32.totalorder %s21, 3
      %p74 = por %p72, %p73
      %p75 = scmp.ne.s32.totalorder %s66, %s67
      %p76 = scmp.eq.s32.totalorder %s21, 0
      %p77 = por %p75, %p76
      %p78 = scmp.ne.s32.totalorder %s66, %s67
      %p79 = scmp.eq.s32.totalorder %s22, 3
      %p80 = por %p78, %p79
      %p82 = scmp.ne.s32.totalorder %s67, %s81
      %p83 = scmp.eq.s32.totalorder %s22, 0
      %p84 = por %p82, %p83
      %s85 = ssub.s32 %s23, %s35
      %s86 = ssub.s32 %s24, %s31
      %s87 = sor.u32 %s85, %s86
      %p88 = scmp.eq.s32.totalorder %s87, 0
      %s90 = sadd.s32 %s89, 1
      %s91 = scalar_select %p88, %s89, %s90
      %p94 = pneg %p88
      %p95 = scmp.eq.s32.totalorder %s16, 3
      %p96 = por %p94, %p95
      %p97 = scmp.ne.s32.totalorder %s89, %s92
      %p98 = scmp.eq.s32.totalorder %s16, 0
      %p99 = por %p97, %p98
      %p100 = scmp.ne.s32.totalorder %s89, %s92
      %p101 = scmp.eq.s32.totalorder %s21, 3
      %p102 = por %p100, %p101
      %p103 = scmp.ne.s32.totalorder %s92, %s93
      %p104 = scmp.eq.s32.totalorder %s21, 0
      %p105 = por %p103, %p104
      %p106 = scmp.ne.s32.totalorder %s92, %s93
      %p107 = scmp.eq.s32.totalorder %s22, 3
      %p108 = por %p106, %p107
      %p110 = scmp.ne.s32.totalorder %s93, %s109
      %p111 = scmp.eq.s32.totalorder %s22, 0
      %p112 = por %p110, %p111
      %s113 = ssub.s32 %s23, %s35
      %s114 = ssub.s32 %s24, %s31
      %s115 = sor.u32 %s113, %s114
      %p116 = scmp.eq.s32.totalorder %s115, 0
      %s118 = sadd.s32 %s117, 1
      %s119 = scalar_select %p116, %s117, %s118
      %p122 = pneg %p116
      %p123 = scmp.eq.s32.totalorder %s16, 3
      %p124 = por %p122, %p123
      %p125 = scmp.ne.s32.totalorder %s117, %s120
      %p126 = scmp.eq.s32.totalorder %s16, 0
      %p127 = por %p125, %p126
      %p128 = scmp.ne.s32.totalorder %s117, %s120
      %p129 = scmp.eq.s32.totalorder %s21, 3
      %p130 = por %p128, %p129
      %p131 = scmp.ne.s32.totalorder %s120, %s121
      %p132 = scmp.eq.s32.totalorder %s21, 0
      %p133 = por %p131, %p132
      %p134 = scmp.ne.s32.totalorder %s120, %s121
      %p135 = scmp.eq.s32.totalorder %s22, 3
      %p136 = por %p134, %p135
      %p138 = scmp.ne.s32.totalorder %s121, %s137
      %p139 = scmp.eq.s32.totalorder %s22, 0
      %p140 = por %p138, %p139
      %p141 = scmp.le.s32.totalorder 1, %s16
      %p142 = scmp.lt.s32.totalorder %s16, 5
      %p143 = pnand %p141, %p142
      %p144 = pneg %p143
      // Predicated region
      $region9: #{tpu_custom_call.1} parent=5 // pred_check
        _
      $region10: #{tpu_custom_call.1} parent=5 // pred_check_branch
        %146 = sbr.rel (%p143) target = $region12
      $region11: #{tpu_custom_call.1} parent=5 // pred_region
        %s147 = ssub.s32 %s16, 1
        // Predicated region
        $region13: #{tpu_custom_call.1} parent=11 // pred_check
          %p148 = pneg %p77
        $region14: #{tpu_custom_call.1} parent=11 // pred_check_branch
          %150 = sbr.rel (%p148) target = $region16
        $region15: #{tpu_custom_call.1} parent=11 // pred_region
          _
        $region16: #{tpu_custom_call.1} parent=11 // pred_fallthru
          _
      $region12: #{tpu_custom_call.1} parent=5 // pred_fallthru
        _
      %p151 = scmp.lt.s32.totalorder %s16, 4
      // Predicated region
      $region17: #{tpu_custom_call.1} parent=5 // pred_check
        %p152 = pneg %p151
      $region18: #{tpu_custom_call.1} parent=5 // pred_check_branch
        %154 = sbr.rel (%p152) target = $region20
      $region19: #{tpu_custom_call.1} parent=5 // pred_region
        // Predicated region
        $region21: #{tpu_custom_call.1} parent=19 // pred_check
          %p155 = pneg %p50
        $region22: #{tpu_custom_call.1} parent=19 // pred_check_branch
          %157 = sbr.rel (%p155) target = $region24
        $region23: #{tpu_custom_call.1} parent=19 // pred_region
          %p158 = scmp.lt.s32.totalorder %s23, 1
          %s159 = scalar_select %p158, %s23, 1
          %p160 = scmp.lt.s32.totalorder %s24, 1
          %s161 = scalar_select %p160, %s24, 1
          %s162 = smul.addr %s161, 20
          %s163 = smul.addr %s159, 40
          %s164 = sadd.s32 %s162, %s163
          %s165 = smul.addr %s164, 4
          %s166 = scalar_lea.vmem %s0, %s165
        $region24: #{tpu_custom_call.1} parent=19 // pred_fallthru
          _
      $region20: #{tpu_custom_call.1} parent=5 // pred_fallthru
        _
      %p167 = scmp.le.s32.totalorder 1, %s16
      %p168 = scmp.lt.s32.totalorder %s16, 5
      %p169 = pnand %p167, %p168
      %p170 = pneg %p169
      // Predicated region
      $region25: #{tpu_custom_call.1} parent=5 // pred_check
        _
      $region26: #{tpu_custom_call.1} parent=5 // pred_check_branch
        %172 = sbr.rel (%p169) target = $region28
      $region27: #{tpu_custom_call.1} parent=5 // pred_region
        %s173 = ssub.s32 %s16, 1
        %p174 = scmp.lt.s32.totalorder %s25, 1
        %s175 = scalar_select %p174, %s25, 1
        %p176 = scmp.lt.s32.totalorder %s26, 1
        %s177 = scalar_select %p176, %s26, 1
        %s178 = smul.addr %s177, 20
        %s179 = smul.addr %s175, 40
        %s180 = sadd.s32 %s178, %s179
        %s181 = smul.addr %s180, 4
        %s182 = scalar_lea.vmem %s0, %s181
        %p183 = pneg %p56
        %p184 = pneg %p53
        %p185 = pneg %p77
        %p186 = pneg %p74
        %p187 = pneg %p105
        %p188 = pneg %p102
        %s189 = sand.u32 %s92, 1
        %s190 = scalar_lea.sflag [#allocation3], %s189
        %s191 = sand.u32 %s92, 1
        %s192 = smul.addr %s191, 64
        %s193 = scalar_lea.vmem [#allocation2], %s192
        %p194 = pneg %p133
        %p195 = pneg %p130
        %s196 = sand.u32 %s120, 1
        %s197 = scalar_lea.sflag [#allocation5], %s196
        %s198 = sand.u32 %s120, 1
        %s199 = smul.addr %s198, 2
        %s200 = scalar_lea.vmem [#allocation4], %s199
        %p201 = scmp.lt.s32.totalorder %s25, 1
        %s202 = scalar_select %p201, %s25, 1
        %p203 = scmp.lt.s32.totalorder %s26, 1
        %s204 = scalar_select %p203, %s26, 1
        %s205 = smul.addr %s204, 20
        %s206 = smul.addr %s202, 40
        %s207 = sadd.s32 %s205, %s206
        %s208 = smul.addr %s207, 4
        %s209 = scalar_lea.vmem %s0, %s208
        %s210 = smul.u32 16, %s26
        %v212 = vld [vmem:[%s209] sm:$0xf]
        %v213 = vld [vmem:[%s209 + $0x4] sm:$0xf]
        %v214 = vld [vmem:[%s209 + $0x8] sm:$0xf]
        %v215 = vld [vmem:[%s209 + $0xc] sm:$0xf]
        %v216 = vld [vmem:[%s209 + $0x10] sm:$0xf]
        %v217 = vld [vmem:[%s209 + $0x14] sm:$0xf]
        %v218 = vld [vmem:[%s209 + $0x18] sm:$0xf]
        %v219 = vld [vmem:[%s209 + $0x1c] sm:$0xf]
        %v220 = vld [vmem:[%s209 + $0x20] sm:$0xf]
        %v221 = vld [vmem:[%s209 + $0x24] sm:$0xf]
        %v222 = vld [vmem:[%s209 + $0x28] sm:$0xf]
        %v223 = vld [vmem:[%s209 + $0x2c] sm:$0xf]
        %v224 = vld [vmem:[%s209 + $0x30] sm:$0xf]
        %v225 = vld [vmem:[%s209 + $0x34] sm:$0xf]
        %v226 = vld [vmem:[%s209 + $0x38] sm:$0xf]
        %v227 = vld [vmem:[%s209 + $0x3c] sm:$0xf]
        %v228 = vld [vmem:[%s209 + $0x40] sm:$0xf]
        %v229 = vld [vmem:[%s209 + $0x44] sm:$0xf]
        %v230 = vld [vmem:[%s209 + $0x48] sm:$0xf]
        %v231 = vld [vmem:[%s209 + $0x4c] sm:$0xf]
        %v232 = vunpack.c.l.bf16 %v212
        %v233 = vunpack.c.l.bf16 %v213
        %v234 = vunpack.c.l.bf16 %v214
        %v235 = vunpack.c.l.bf16 %v215
        %v236 = vunpack.c.l.bf16 %v216
        %v237 = vunpack.c.l.bf16 %v217
        %v238 = vunpack.c.l.bf16 %v218
        %v239 = vunpack.c.l.bf16 %v219
        %v240 = vunpack.c.l.bf16 %v220
        %v241 = vunpack.c.l.bf16 %v221
        %v242 = vunpack.c.l.bf16 %v222
        %v243 = vunpack.c.l.bf16 %v223
        %v244 = vunpack.c.l.bf16 %v224
        %v245 = vunpack.c.l.bf16 %v225
        %v246 = vunpack.c.l.bf16 %v226
        %v247 = vunpack.c.l.bf16 %v227
        %v248 = vunpack.c.l.bf16 %v228
        %v249 = vunpack.c.l.bf16 %v229
        %v250 = vunpack.c.l.bf16 %v230
        %v251 = vunpack.c.l.bf16 %v231
        %268 = vrot.lane.b32.xlu0 %v234, 12
        %v269 = vpop.permute.xlu0 %268
        %270 = vrot.lane.b32.xlu0 %v235, 12
        %v271 = vpop.permute.xlu0 %270
        %272 = vrot.lane.b32.xlu0 %v236, 12
        %v273 = vpop.permute.xlu0 %272
        %274 = vrot.lane.b32.xlu0 %v237, 12
        %v275 = vpop.permute.xlu0 %274
        %276 = vrot.lane.b32.xlu0 %v238, 12
        %v277 = vpop.permute.xlu0 %276
        %278 = vrot.lane.b32.xlu0 %v239, 12
        %v279 = vpop.permute.xlu0 %278
        %280 = vrot.lane.b32.xlu0 %v240, 12
        %v281 = vpop.permute.xlu0 %280
        %282 = vrot.lane.b32.xlu0 %v241, 12
        %v283 = vpop.permute.xlu0 %282
        %284 = vrot.lane.b32.xlu0 %v242, 12
        %v285 = vpop.permute.xlu0 %284
        %286 = vrot.lane.b32.xlu0 %v243, 12
        %v287 = vpop.permute.xlu0 %286
        %288 = vrot.lane.b32.xlu0 %v244, 12
        %v289 = vpop.permute.xlu0 %288
        %290 = vrot.lane.b32.xlu0 %v245, 12
        %v291 = vpop.permute.xlu0 %290
        %292 = vrot.lane.b32.xlu0 %v246, 12
        %v293 = vpop.permute.xlu0 %292
        %294 = vrot.lane.b32.xlu0 %v247, 12
        %v295 = vpop.permute.xlu0 %294
        %296 = vrot.lane.b32.xlu0 %v248, 12
        %v297 = vpop.permute.xlu0 %296
        %298 = vrot.lane.b32.xlu0 %v249, 12
        %v299 = vpop.permute.xlu0 %298
        %318 = vrot.lane.b32.xlu0 %v236, 24
        %v319 = vpop.permute.xlu0 %318
        %320 = vrot.lane.b32.xlu0 %v237, 24
        %v321 = vpop.permute.xlu0 %320
        %322 = vrot.lane.b32.xlu0 %v238, 24
        %v323 = vpop.permute.xlu0 %322
        %324 = vrot.lane.b32.xlu0 %v239, 24
        %v325 = vpop.permute.xlu0 %324
        %326 = vrot.lane.b32.xlu0 %v240, 24
        %v327 = vpop.permute.xlu0 %326
        %328 = vrot.lane.b32.xlu0 %v241, 24
        %v329 = vpop.permute.xlu0 %328
        %330 = vrot.lane.b32.xlu0 %v242, 24
        %v331 = vpop.permute.xlu0 %330
        %332 = vrot.lane.b32.xlu0 %v243, 24
        %v333 = vpop.permute.xlu0 %332
        %334 = vrot.lane.b32.xlu0 %v244, 24
        %v335 = vpop.permute.xlu0 %334
        %336 = vrot.lane.b32.xlu0 %v245, 24
        %v337 = vpop.permute.xlu0 %336
        %338 = vrot.lane.b32.xlu0 %v246, 24
        %v339 = vpop.permute.xlu0 %338
        %340 = vrot.lane.b32.xlu0 %v247, 24
        %v341 = vpop.permute.xlu0 %340
        %342 = vrot.lane.b32.xlu0 %v248, 24
        %v343 = vpop.permute.xlu0 %342
        %344 = vrot.lane.b32.xlu0 %v249, 24
        %v345 = vpop.permute.xlu0 %344
        %346 = vrot.lane.b32.xlu0 %v250, 24
        %v347 = vpop.permute.xlu0 %346
        %348 = vrot.lane.b32.xlu0 %v251, 24
        %v349 = vpop.permute.xlu0 %348
        %vm366 = vcmask 97280
        %v367 = vsel %vm366, %v232, %v269
        %v368 = vsel %vm366, %v233, %v271
        %v369 = vsel %vm366, %v234, %v273
        %v370 = vsel %vm366, %v235, %v275
        %v371 = vsel %vm366, %v236, %v277
        %v372 = vsel %vm366, %v237, %v279
        %v373 = vsel %vm366, %v238, %v281
        %v374 = vsel %vm366, %v239, %v283
        %v375 = vsel %vm366, %v240, %v285
        %v376 = vsel %vm366, %v241, %v287
        %v377 = vsel %vm366, %v242, %v289
        %v378 = vsel %vm366, %v243, %v291
        %v379 = vsel %vm366, %v244, %v293
        %v380 = vsel %vm366, %v245, %v295
        %v381 = vsel %vm366, %v246, %v297
        %v382 = vsel %vm366, %v247, %v299
        %vm383 = vcmask 195584
        %v384 = vsel %vm383, %v367, %v319
        %v385 = vsel %vm383, %v368, %v321
        %v386 = vsel %vm383, %v369, %v323
        %v387 = vsel %vm383, %v370, %v325
        %v388 = vsel %vm383, %v371, %v327
        %v389 = vsel %vm383, %v372, %v329
        %v390 = vsel %vm383, %v373, %v331
        %v391 = vsel %vm383, %v374, %v333
        %v392 = vsel %vm383, %v375, %v335
        %v393 = vsel %vm383, %v376, %v337
        %v394 = vsel %vm383, %v377, %v339
        %v395 = vsel %vm383, %v378, %v341
        %v396 = vsel %vm383, %v379, %v343
        %v397 = vsel %vm383, %v380, %v345
        %v398 = vsel %vm383, %v381, %v347
        %v399 = vsel %vm383, %v382, %v349
        %v400 = vpack.c.bf16 %v385, %v384
        %v401 = vpack.c.bf16 %v387, %v386
        %v402 = vpack.c.bf16 %v389, %v388
        %v403 = vpack.c.bf16 %v391, %v390
        %v404 = vpack.c.bf16 %v393, %v392
        %v405 = vpack.c.bf16 %v395, %v394
        %v406 = vpack.c.bf16 %v397, %v396
        %v407 = vpack.c.bf16 %v399, %v398
        %v408 = vld [vmem:[%s1] sm:$0xf]
        %v409 = vld [vmem:[%s1 + $0x4] sm:$0xf]
        %v410 = vld [vmem:[%s1 + $0x8] sm:$0xf]
        %v411 = vld [vmem:[%s1 + $0xc] sm:$0xf]
        %v412 = vld [vmem:[%s1 + $0x10] sm:$0x3]
        %v418 = vunpack.c.l.b16 %v408
        %v419 = vunpack.c.l.b16 %v409
        %v420 = vunpack.c.l.b16 %v410
        %v421 = vunpack.c.l.b16 %v411
        %v422 = vunpack.c.l.b16 %v412
        %v423 = vpack.c.b16 %v419, %v418
        %v424 = vpack.c.b16 %v421, %v420
        %v425 = vpack.c.b16 %v422, %v422
        %vm428 = vcmask 293888
        %v430 = vsel %vm428, %v400, 0
        %v433 = vsel %vm428, %v401, 0
        %v436 = vsel %vm428, %v402, 0
        %v439 = vsel %vm428, %v403, 0
        %v442 = vsel %vm428, %v404, 0
        %v445 = vsel %vm428, %v405, 0
        %v448 = vsel %vm428, %v406, 0
        %v451 = vsel %vm428, %v407, 0
        %vm453 = vcmask 1041408
        %v455 = vsel %vm453, %v425, 0
        %457 = vmatprep.subr.bf16.mxu0 0
        %458 = vmatpush1.bf16.msra.mxu0 %v423
        %459 = vmatprep.subr.bf16.mxu0 0
        %460 = vmatpush1.bf16.msra.mxu0 %v424
        %461 = vmatprep.subr.bf16.mxu0 0
        %462 = vmatpush1.bf16.msra.mxu0 %v455
        %463 = vmatprep.subr.bf16.mxu0 0
        %464 = vmatpush1.bf16.msra.mxu0 0
        %465 = vmatprep.subr.bf16.mxu0 0
        %466 = vmatpush1.bf16.msra.mxu0 0
        %467 = vmatprep.subr.bf16.mxu0 0
        %468 = vmatpush1.bf16.msra.mxu0 0
        %469 = vmatprep.subr.bf16.mxu0 0
        %470 = vmatpush1.bf16.msra.mxu0 0
        %471 = vmatprep.subr.bf16.mxu0 0
        %472 = vmatpush1.bf16.msra.mxu0 0
        %473 = vmatprep.subr.bf16.mxu0 0
        %474 = vmatpush1.bf16.msra.mxu0 0
        %475 = vmatprep.subr.bf16.mxu0 0
        %476 = vmatpush1.bf16.msra.mxu0 0
        %477 = vmatprep.subr.bf16.mxu0 0
        %478 = vmatpush1.bf16.msra.mxu0 0
        %479 = vmatprep.subr.bf16.mxu0 0
        %480 = vmatpush1.bf16.msra.mxu0 0
        %481 = vmatprep.subr.bf16.mxu0 0
        %482 = vmatpush1.bf16.msra.mxu0 0
        %483 = vmatprep.subr.bf16.mxu0 0
        %484 = vmatpush1.bf16.msra.mxu0 0
        %485 = vmatprep.subr.bf16.mxu0 0
        %486 = vmatpush1.bf16.msra.mxu0 0
        %487 = vmatprep.subr.bf16.mxu0 0
        %488 = vmatpush1.bf16.msra.mxu0 0
        %489 = vmatprep.mubr.bf16.mxu0 0
        %490 = vmatmul.mubr.bf16.gmra.mrb[0].mxu0 %v430
        %v491 = vpop.f32.mrb[0].mxu0
        %v492 = vadd.f32 0.0, %v491
        %v493 = vpop.f32.mrb[0].mxu0
        %v494 = vpop.f32.mrb[0].mxu0
        %v495 = vadd.f32 0.0, %v494
        %v496 = vpop.f32.mrb[0].mxu0
        %497 = vmatprep.mubr.bf16.mxu0 0
        %498 = vmatmul.mubr.bf16.gmra.mrb[0].mxu0 %v433
        %v499 = vpop.f32.mrb[0].mxu0
        %v500 = vadd.f32 0.0, %v499
        %v501 = vpop.f32.mrb[0].mxu0
        %v502 = vpop.f32.mrb[0].mxu0
        %v503 = vadd.f32 0.0, %v502
        %v504 = vpop.f32.mrb[0].mxu0
        %505 = vmatprep.mubr.bf16.mxu0 0
        %506 = vmatmul.mubr.bf16.gmra.mrb[0].mxu0 %v436
        %v507 = vpop.f32.mrb[0].mxu0
        %v508 = vadd.f32 0.0, %v507
        %v509 = vpop.f32.mrb[0].mxu0
        %v510 = vpop.f32.mrb[0].mxu0
        %v511 = vadd.f32 0.0, %v510
        %v512 = vpop.f32.mrb[0].mxu0
        %513 = vmatprep.mubr.bf16.mxu0 0
        %514 = vmatmul.mubr.bf16.gmra.mrb[0].mxu0 %v439
        %v515 = vpop.f32.mrb[0].mxu0
        %v516 = vadd.f32 0.0, %v515
        %v517 = vpop.f32.mrb[0].mxu0
        %v518 = vpop.f32.mrb[0].mxu0
        %v519 = vadd.f32 0.0, %v518
        %v520 = vpop.f32.mrb[0].mxu0
        %521 = vmatprep.mubr.bf16.mxu0 0
        %522 = vmatmul.mubr.bf16.gmra.mrb[0].mxu0 %v442
        %v523 = vpop.f32.mrb[0].mxu0
        %v524 = vadd.f32 0.0, %v523
        %v525 = vpop.f32.mrb[0].mxu0
        %v526 = vpop.f32.mrb[0].mxu0
        %v527 = vadd.f32 0.0, %v526
        %v528 = vpop.f32.mrb[0].mxu0
        %529 = vmatprep.mubr.bf16.mxu0 0
        %530 = vmatmul.mubr.bf16.gmra.mrb[0].mxu0 %v445
        %v531 = vpop.f32.mrb[0].mxu0
        %v532 = vadd.f32 0.0, %v531
        %v533 = vpop.f32.mrb[0].mxu0
        %v534 = vpop.f32.mrb[0].mxu0
        %v535 = vadd.f32 0.0, %v534
        %v536 = vpop.f32.mrb[0].mxu0
        %537 = vmatprep.mubr.bf16.mxu0 0
        %538 = vmatmul.mubr.bf16.gmra.mrb[0].mxu0 %v448
        %v539 = vpop.f32.mrb[0].mxu0
        %v540 = vadd.f32 0.0, %v539
        %v541 = vpop.f32.mrb[0].mxu0
        %v542 = vpop.f32.mrb[0].mxu0
        %v543 = vadd.f32 0.0, %v542
        %v544 = vpop.f32.mrb[0].mxu0
        %545 = vmatprep.mubr.bf16.mxu0 0
        %546 = vmatmul.mubr.bf16.gmra.mrb[0].mxu0 %v451
        %v547 = vpop.f32.mrb[0].mxu0
        %v548 = vadd.f32 0.0, %v547
        %v549 = vpop.f32.mrb[0].mxu0
        %v550 = vpop.f32.mrb[0].mxu0
        %v551 = vadd.f32 0.0, %v550
        %v552 = vpop.f32.mrb[0].mxu0
        %553 = vdwg.mxu0
        %v554 = vpack.c.bf16 %v495, %v492
        %v555 = vpack.c.bf16 %v503, %v500
        %v556 = vpack.c.bf16 %v511, %v508
        %v557 = vpack.c.bf16 %v519, %v516
        %v558 = vpack.c.bf16 %v527, %v524
        %v559 = vpack.c.bf16 %v535, %v532
        %v560 = vpack.c.bf16 %v543, %v540
        %v561 = vpack.c.bf16 %v551, %v548
        %v570 = vunpack.c.l.b16 %v554
        %v571 = vunpack.c.h.b16 %v554
        %v572 = vunpack.c.l.b16 %v555
        %v573 = vunpack.c.h.b16 %v555
        %v574 = vunpack.c.l.b16 %v556
        %v575 = vunpack.c.h.b16 %v556
        %v576 = vunpack.c.l.b16 %v557
        %v577 = vunpack.c.h.b16 %v557
        %v578 = vunpack.c.l.b16 %v558
        %v579 = vunpack.c.h.b16 %v558
        %v580 = vunpack.c.l.b16 %v559
        %v581 = vunpack.c.h.b16 %v559
        %v582 = vunpack.c.l.b16 %v560
        %v583 = vunpack.c.h.b16 %v560
        %v584 = vunpack.c.l.b16 %v561
        %v585 = vunpack.c.h.b16 %v561
        %v586 = vpack.c.b16 %v570, %v570
        %v587 = vpack.c.b16 %v571, %v571
        %v588 = vpack.c.b16 %v572, %v572
        %v589 = vpack.c.b16 %v573, %v573
        %v590 = vpack.c.b16 %v574, %v574
        %v591 = vpack.c.b16 %v575, %v575
        %v592 = vpack.c.b16 %v576, %v576
        %v593 = vpack.c.b16 %v577, %v577
        %v594 = vpack.c.b16 %v578, %v578
        %v595 = vpack.c.b16 %v579, %v579
        %v596 = vpack.c.b16 %v580, %v580
        %v597 = vpack.c.b16 %v581, %v581
        %v598 = vpack.c.b16 %v582, %v582
        %v599 = vpack.c.b16 %v583, %v583
        %v600 = vpack.c.b16 %v584, %v584
        %v601 = vpack.c.b16 %v585, %v585
        %618 = vst [vmem:[%s193] sm:$0xf] %v586
        %619 = vst [vmem:[%s193 + $0x4] sm:$0xf] %v587
        %620 = vst [vmem:[%s193 + $0x8] sm:$0xf] %v588
        %621 = vst [vmem:[%s193 + $0xc] sm:$0xf] %v589
        %622 = vst [vmem:[%s193 + $0x10] sm:$0xf] %v590
        %623 = vst [vmem:[%s193 + $0x14] sm:$0xf] %v591
        %624 = vst [vmem:[%s193 + $0x18] sm:$0xf] %v592
        %625 = vst [vmem:[%s193 + $0x1c] sm:$0xf] %v593
        %626 = vst [vmem:[%s193 + $0x20] sm:$0xf] %v594
        %627 = vst [vmem:[%s193 + $0x24] sm:$0xf] %v595
        %628 = vst [vmem:[%s193 + $0x28] sm:$0xf] %v596
        %629 = vst [vmem:[%s193 + $0x2c] sm:$0xf] %v597
        %630 = vst [vmem:[%s193 + $0x30] sm:$0xf] %v598
        %631 = vst [vmem:[%s193 + $0x34] sm:$0xf] %v599
        %632 = vst [vmem:[%s193 + $0x38] sm:$0xf] %v600
        %633 = vst [vmem:[%s193 + $0x3c] sm:$0xf] %v601
        %v634 = vadd.f32 %v492, %v495
        %v635 = vadd.f32 %v634, %v500
        %v636 = vadd.f32 %v635, %v503
        %v637 = vadd.f32 %v636, %v508
        %v638 = vadd.f32 %v637, %v511
        %v639 = vadd.f32 %v638, %v516
        %v640 = vadd.f32 %v639, %v519
        %v641 = vadd.f32 %v640, %v524
        %v642 = vadd.f32 %v641, %v527
        %v643 = vadd.f32 %v642, %v532
        %v644 = vadd.f32 %v643, %v535
        %v645 = vadd.f32 %v644, %v540
        %v646 = vadd.f32 %v645, %v543
        %v647 = vadd.f32 %v646, %v548
        %v648 = vadd.f32 %v647, %v551
        %v649 = vrot.slane %v648, 4
        %v650 = vadd.f32 %v648, %v649
        %v651 = vrot.slane %v650, 2
        %v652 = vadd.f32 %v650, %v651
        %v653 = vrot.slane %v652, 1
        %v654 = vadd.f32 %v652, %v653
        %655 = vst [vmem:[%s200] sm:$0x1] %v654
        %v656 = vmul.f32 %v492, %v492
        %v657 = vmul.f32 %v495, %v495
        %v658 = vmul.f32 %v500, %v500
        %v659 = vmul.f32 %v503, %v503
        %v660 = vmul.f32 %v508, %v508
        %v661 = vmul.f32 %v511, %v511
        %v662 = vmul.f32 %v516, %v516
        %v663 = vmul.f32 %v519, %v519
        %v664 = vmul.f32 %v524, %v524
        %v665 = vmul.f32 %v527, %v527
        %v666 = vmul.f32 %v532, %v532
        %v667 = vmul.f32 %v535, %v535
        %v668 = vmul.f32 %v540, %v540
        %v669 = vmul.f32 %v543, %v543
        %v670 = vmul.f32 %v548, %v548
        %v671 = vmul.f32 %v551, %v551
        %v672 = vadd.f32 %v656, %v657
        %v673 = vadd.f32 %v672, %v658
        %v674 = vadd.f32 %v673, %v659
        %v675 = vadd.f32 %v674, %v660
        %v676 = vadd.f32 %v675, %v661
        %v677 = vadd.f32 %v676, %v662
        %v678 = vadd.f32 %v677, %v663
        %v679 = vadd.f32 %v678, %v664
        %v680 = vadd.f32 %v679, %v665
        %v681 = vadd.f32 %v680, %v666
        %v682 = vadd.f32 %v681, %v667
        %v683 = vadd.f32 %v682, %v668
        %v684 = vadd.f32 %v683, %v669
        %v685 = vadd.f32 %v684, %v670
        %v686 = vadd.f32 %v685, %v671
        %v687 = vrot.slane %v686, 4
        %v688 = vadd.f32 %v686, %v687
        %v689 = vrot.slane %v688, 2
        %v690 = vadd.f32 %v688, %v689
        %v691 = vrot.slane %v690, 1
        %v692 = vadd.f32 %v690, %v691
        %693 = vst [vmem:[%s200 + $0x1] sm:$0x1] %v692
        %s694 = sand.u32 %s92, 1
        %s695 = scalar_lea.sflag [#allocation3], %s694
        %s696 = sand.u32 %s92, 1
        %s697 = smul.addr %s696, 64
        %s698 = scalar_lea.vmem [#allocation2], %s697
        %s699 = sand.u32 %s120, 1
        %s700 = scalar_lea.sflag [#allocation5], %s699
        %s701 = sand.u32 %s120, 1
        %s702 = smul.addr %s701, 2
        %s703 = scalar_lea.vmem [#allocation4], %s702
        // Predicated region
        $region29: #{tpu_custom_call.1} parent=27 // pred_check
          %p704 = pneg %p102
        $region30: #{tpu_custom_call.1} parent=27 // pred_check_branch
          %706 = sbr.rel (%p704) target = $region32
        $region31: #{tpu_custom_call.1} parent=27 // pred_region
          %s707 = smul.u32 16, %s26
          %s709 = ssub.s32 1024, 1024
          %710 = vsyncadd %s695, %s709
          %s711 = smul.addr %s25, 32
          %s712 = sadd.s32 %s707, %s711
          %s713 = smul.addr %s712, 64
          %s714 = scalar_lea.hbm %s2, %s713
          %s715 = sshll.u32 %s698, 4
          %s716 = int_to_ptr.vmem [resolvable:$true] %s715
          %721 = dma.vmem_to_hbm [thread:$0]  %s716, 1024, %s714, %s695, 64, 64, 4
        $region32: #{tpu_custom_call.1} parent=27 // pred_fallthru
          _
        // Predicated region
        $region33: #{tpu_custom_call.1} parent=27 // pred_check
          %p722 = pneg %p130
        $region34: #{tpu_custom_call.1} parent=27 // pred_check_branch
          %724 = sbr.rel (%p722) target = $region36
        $region35: #{tpu_custom_call.1} parent=27 // pred_region
          %s726 = ssub.s32 32, 32
          %727 = vsyncadd %s700, %s726
          %s728 = smul.addr %s25, 2
          %s729 = sadd.s32 %s26, %s728
          %s730 = smul.addr %s729, 32
          %s731 = scalar_lea.hbm %s3, %s730
          %s733 = sshll.u32 %s703, 4
          %s734 = int_to_ptr.vmem [resolvable:$true] %s733
          %736 = dma.vmem_to_hbm [thread:$0]  %s734, 32, %s731, %s700
        $region36: #{tpu_custom_call.1} parent=27 // pred_fallthru
          _
      $region28: #{tpu_custom_call.1} parent=5 // pred_fallthru
        _
      %p737 = scmp.le.s32.totalorder 2, %s16
      // Predicated region
      $region37: #{tpu_custom_call.1} parent=5 // pred_check
        %p738 = pneg %p737
      $region38: #{tpu_custom_call.1} parent=5 // pred_check_branch
        %740 = sbr.rel (%p738) target = $region40
      $region39: #{tpu_custom_call.1} parent=5 // pred_region
        %s741 = ssub.s32 %s16, 2
        // Predicated region
        $region41: #{tpu_custom_call.1} parent=39 // pred_check
          %p742 = pneg %p108
        $region42: #{tpu_custom_call.1} parent=39 // pred_check_branch
          %744 = sbr.rel (%p742) target = $region44
        $region43: #{tpu_custom_call.1} parent=39 // pred_region
          %s745 = sand.u32 %s93, 1
          %s746 = scalar_lea.sflag [#allocation3], %s745
          %s747 = sand.u32 %s93, 1
          %s748 = smul.addr %s747, 64
          %s749 = scalar_lea.vmem [#allocation2], %s748
          %750 = dma.done %s746, 1024
        $region44: #{tpu_custom_call.1} parent=39 // pred_fallthru
          _
        // Predicated region
        $region45: #{tpu_custom_call.1} parent=39 // pred_check
          %p751 = pneg %p136
        $region46: #{tpu_custom_call.1} parent=39 // pred_check_branch
          %753 = sbr.rel (%p751) target = $region48
        $region47: #{tpu_custom_call.1} parent=39 // pred_region
          %s754 = sand.u32 %s121, 1
          %s755 = scalar_lea.sflag [#allocation5], %s754
          %s756 = sand.u32 %s121, 1
          %s757 = smul.addr %s756, 2
          %s758 = scalar_lea.vmem [#allocation4], %s757
          %759 = dma.done %s755, 32
        $region48: #{tpu_custom_call.1} parent=39 // pred_fallthru
          _
      $region40: #{tpu_custom_call.1} parent=5 // pred_fallthru
        _
    $region6: #{tpu_custom_call.1} parent=1 // loop_footer
      %s20 = sadd.s32 1, %s16
    $region7: #{tpu_custom_call.1} parent=1 // loop_footer_branch
      %15 = sbr.rel target = $region3
    $region8: #{tpu_custom_call.1} parent=1 // loop_exit
      _
    %760 = vsyncpa [#allocation3], 1
    %s761 = scalar_lea.sflag [#allocation3], 1
    %762 = vsyncpa %s761, 1
    %763 = vsyncpa [#allocation5], 1
    %s764 = scalar_lea.sflag [#allocation5], 1
    %765 = vsyncpa %s764, 1

// kernel: tpu_custom_call.1
$region0: #{tpu_custom_call.1}
  #allocation0 [shape = 'u32[]', space=smem, size = 0x4, offset = 0x4, fixed_abs, tag = 'smem constant byte address 0x4 - core index']
  #allocation1 [shape = 'u32[144,128]{1,0:T(1,128)}', space=vmem, size = 0x12000, scoped, tag = 'internal scratch']
  %s0 = inlined_call_operand.vmem [shape: bf16[2,2,160,12], index: 0, kind: input, shape index: {}]
  %s1 = inlined_call_operand.vmem [shape: bf16[3,12,128], index: 1, kind: input, shape index: {}]
  %s2 = inlined_call_operand.hbm [shape: bf16[2,256,128], index: 2, kind: output, shape index: {0}]
  %s3 = inlined_call_operand.hbm [shape: f32[2,2,2,128], index: 3, kind: output, shape index: {1}]
  %4 = xla_tuple %s2, %s3
  %s5 = sld [smem:[#allocation0]]
  $region49: #{tpu_custom_call.1} parent=0
    _
  %s7 = ssub.s32 1, %s5
  %s8 = scalar_select 0, %s7, %s5
  $region1: #{tpu_custom_call.1} parent=0
    #allocation2 [shape = 'u8[65536]{0}', space=vmem, size = 0x10000, scoped, tag = 'output window, operand 0']
    #allocation3 [shape = 's32[2]{0}', space=sflag, size = 0x8, scoped, tag = 'scoped memory for tpu_custom_call.1']
    #allocation4 [shape = 'u8[2048]{0}', space=vmem, size = 0x800, scoped, tag = 'output window, operand 1']
    #allocation5 [shape = 's32[2]{0}', space=sflag, size = 0x8, scoped, tag = 'scoped memory for tpu_custom_call.1']
    %9 = vsyncpa [#allocation3], 0
    %s10 = scalar_lea.sflag [#allocation3], 1
    %11 = vsyncpa %s10, 0
    %12 = vsyncpa [#allocation5], 0
    %s13 = scalar_lea.sflag [#allocation5], 1
    %14 = vsyncpa %s13, 0
    loop: start=0, step=1, limit=6
    $region2: #{tpu_custom_call.1} parent=1 // loop_pre_header
      _
    $region3: #{tpu_custom_call.1} parent=1 // loop_header
      %s16 = sphi 0, %s20
      %p17 = scmp.ge.s32.totalorder %s16, 6
      %s23 = sphi 0, %s35
      %s24 = sphi 0, %s31
      %s25 = sphi 0, %s23
      %s26 = sphi 0, %s24
      %s27 = sphi 0, %s25
      %s28 = sphi 0, %s26
      %s40 = sphi 0, %s42
      %s43 = sphi 0, %s40
      %s44 = sphi 0, %s43
      %s60 = sphi 0, %s44
      %s64 = sphi 0, %s64
      %s66 = sphi 0, %s64
      %s67 = sphi 0, %s66
      %s81 = sphi 0, %s67
      %s89 = sphi 0, %s91
      %s92 = sphi 0, %s89
      %s93 = sphi 0, %s92
      %s109 = sphi 0, %s93
      %s117 = sphi 0, %s119
      %s120 = sphi 0, %s117
      %s121 = sphi 0, %s120
      %s137 = sphi 0, %s121
    $region4: #{tpu_custom_call.1} parent=1 // loop_header_branch
      %19 = sbr.rel (%p17) target = $region8
    $region5: #{tpu_custom_call.1} parent=1 // loop_body
      %s21 = ssub.s32 %s16, 1
      %s22 = ssub.s32 %s16, 2
      %s29 = sadd.s32 1, %s24
      %p30 = scmp.ge.s32.totalorder %s29, 2
      %s31 = scalar_select %p30, 0, %s29
      %s32 = sadd.s32 1, %s23
      %s33 = scalar_select %p30, %s32, %s23
      %p34 = scmp.ge.s32.totalorder %s33, 2
      %s35 = scalar_select %p34, 0, %s33
      %s36 = ssub.s32 %s23, %s35
      %s37 = ssub.s32 %s24, %s31
      %s38 = sor.u32 %s36, %s37
      %p39 = scmp.eq.s32.totalorder %s38, 0
      %s41 = sadd.s32 %s40, 1
      %s42 = scalar_select %p39, %s40, %s41
      %p45 = pneg %p39
      %p46 = scmp.eq.s32.totalorder %s16, 3
      %p47 = por %p45, %p46
      %p48 = scmp.ne.s32.totalorder %s40, %s43
      %p49 = scmp.eq.s32.totalorder %s16, 0
      %p50 = por %p48, %p49
      %p51 = scmp.ne.s32.totalorder %s40, %s43
      %p52 = scmp.eq.s32.totalorder %s21, 3
      %p53 = por %p51, %p52
      %p54 = scmp.ne.s32.totalorder %s43, %s44
      %p55 = scmp.eq.s32.totalorder %s21, 0
      %p56 = por %p54, %p55
      %p57 = scmp.ne.s32.totalorder %s43, %s44
      %p58 = scmp.eq.s32.totalorder %s22, 3
      %p59 = por %p57, %p58
      %p61 = scmp.ne.s32.totalorder %s44, %s60
      %p62 = scmp.eq.s32.totalorder %s22, 0
      %p63 = por %p61, %p62
      %s65 = sadd.s32 %s64, 1
      %p68 = scmp.eq.s32.totalorder %s16, 3
      %p69 = scmp.ne.s32.totalorder %s64, %s66
      %p70 = scmp.eq.s32.totalorder %s16, 0
      %p71 = por %p69, %p70
      %p72 = scmp.ne.s32.totalorder %s64, %s66
      %p73 = scmp.eq.s32.totalorder %s21, 3
      %p74 = por %p72, %p73
      %p75 = scmp.ne.s32.totalorder %s66, %s67
      %p76 = scmp.eq.s32.totalorder %s21, 0
      %p77 = por %p75, %p76
      %p78 = scmp.ne.s32.totalorder %s66, %s67
      %p79 = scmp.eq.s32.totalorder %s22, 3
      %p80 = por %p78, %p79
      %p82 = scmp.ne.s32.totalorder %s67, %s81
      %p83 = scmp.eq.s32.totalorder %s22, 0
      %p84 = por %p82, %p83
      %s85 = ssub.s32 %s23, %s35
      %s86 = ssub.s32 %s24, %s31
      %s87 = sor.u32 %s85, %s86
      %p88 = scmp.eq.s32.totalorder %s87, 0
      %s90 = sadd.s32 %s89, 1
      %s91 = scalar_select %p88, %s89, %s90
      %p94 = pneg %p88
      %p95 = scmp.eq.s32.totalorder %s16, 3
      %p96 = por %p94, %p95
      %p97 = scmp.ne.s32.totalorder %s89, %s92
      %p98 = scmp.eq.s32.totalorder %s16, 0
      %p99 = por %p97, %p98
      %p100 = scmp.ne.s32.totalorder %s89, %s92
      %p101 = scmp.eq.s32.totalorder %s21, 3
      %p102 = por %p100, %p101
      %p103 = scmp.ne.s32.totalorder %s92, %s93
      %p104 = scmp.eq.s32.totalorder %s21, 0
      %p105 = por %p103, %p104
      %p106 = scmp.ne.s32.totalorder %s92, %s93
      %p107 = scmp.eq.s32.totalorder %s22, 3
      %p108 = por %p106, %p107
      %p110 = scmp.ne.s32.totalorder %s93, %s109
      %p111 = scmp.eq.s32.totalorder %s22, 0
      %p112 = por %p110, %p111
      %s113 = ssub.s32 %s23, %s35
      %s114 = ssub.s32 %s24, %s31
      %s115 = sor.u32 %s113, %s114
      %p116 = scmp.eq.s32.totalorder %s115, 0
      %s118 = sadd.s32 %s117, 1
      %s119 = scalar_select %p116, %s117, %s118
      %p122 = pneg %p116
      %p123 = scmp.eq.s32.totalorder %s16, 3
      %p124 = por %p122, %p123
      %p125 = scmp.ne.s32.totalorder %s117, %s120
      %p126 = scmp.eq.s32.totalorder %s16, 0
      %p127 = por %p125, %p126
      %p128 = scmp.ne.s32.totalorder %s117, %s120
      %p129 = scmp.eq.s32.totalorder %s21, 3
      %p130 = por %p128, %p129
      %p131 = scmp.ne.s32.totalorder %s120, %s121
      %p132 = scmp.eq.s32.totalorder %s21, 0
      %p133 = por %p131, %p132
      %p134 = scmp.ne.s32.totalorder %s120, %s121
      %p135 = scmp.eq.s32.totalorder %s22, 3
      %p136 = por %p134, %p135
      %p138 = scmp.ne.s32.totalorder %s121, %s137
      %p139 = scmp.eq.s32.totalorder %s22, 0
      %p140 = por %p138, %p139
      %p141 = scmp.le.s32.totalorder 1, %s16
      %p142 = scmp.lt.s32.totalorder %s16, 5
      %p143 = pnand %p141, %p142
      %p144 = pneg %p143
      // Predicated region
      $region9: #{tpu_custom_call.1} parent=5 // pred_check
        _
      $region10: #{tpu_custom_call.1} parent=5 // pred_check_branch
        %146 = sbr.rel (%p143) target = $region12
      $region11: #{tpu_custom_call.1} parent=5 // pred_region
        %s147 = ssub.s32 %s16, 1
        // Predicated region
        $region13: #{tpu_custom_call.1} parent=11 // pred_check
          %p148 = pneg %p77
        $region14: #{tpu_custom_call.1} parent=11 // pred_check_branch
          %150 = sbr.rel (%p148) target = $region16
        $region15: #{tpu_custom_call.1} parent=11 // pred_region
          _
        $region16: #{tpu_custom_call.1} parent=11 // pred_fallthru
          _
      $region12: #{tpu_custom_call.1} parent=5 // pred_fallthru
        _
      %p151 = scmp.lt.s32.totalorder %s16, 4
      // Predicated region
      $region17: #{tpu_custom_call.1} parent=5 // pred_check
        %p152 = pneg %p151
      $region18: #{tpu_custom_call.1} parent=5 // pred_check_branch
        %154 = sbr.rel (%p152) target = $region20
      $region19: #{tpu_custom_call.1} parent=5 // pred_region
        // Predicated region
        $region21: #{tpu_custom_call.1} parent=19 // pred_check
          %p155 = pneg %p50
        $region22: #{tpu_custom_call.1} parent=19 // pred_check_branch
          %157 = sbr.rel (%p155) target = $region24
        $region23: #{tpu_custom_call.1} parent=19 // pred_region
          %p158 = scmp.lt.s32.totalorder %s23, 1
          %s159 = scalar_select %p158, %s23, 1
          %p160 = scmp.lt.s32.totalorder %s24, 1
          %s161 = scalar_select %p160, %s24, 1
          %s162 = smul.addr %s161, 20
          %s163 = smul.addr %s159, 40
          %s164 = sadd.s32 %s162, %s163
          %s165 = smul.addr %s164, 4
          %s166 = scalar_lea.vmem %s0, %s165
        $region24: #{tpu_custom_call.1} parent=19 // pred_fallthru
          _
      $region20: #{tpu_custom_call.1} parent=5 // pred_fallthru
        _
      %p167 = scmp.le.s32.totalorder 1, %s16
      %p168 = scmp.lt.s32.totalorder %s16, 5
      %p169 = pnand %p167, %p168
      %p170 = pneg %p169
      // Predicated region
      $region25: #{tpu_custom_call.1} parent=5 // pred_check
        _
      $region26: #{tpu_custom_call.1} parent=5 // pred_check_branch
        %172 = sbr.rel (%p169) target = $region28
      $region27: #{tpu_custom_call.1} parent=5 // pred_region
        %s173 = ssub.s32 %s16, 1
        %p174 = scmp.lt.s32.totalorder %s25, 1
        %s175 = scalar_select %p174, %s25, 1
        %p176 = scmp.lt.s32.totalorder %s26, 1
        %s177 = scalar_select %p176, %s26, 1
        %s178 = smul.addr %s177, 20
        %s179 = smul.addr %s175, 40
        %s180 = sadd.s32 %s178, %s179
        %s181 = smul.addr %s180, 4
        %s182 = scalar_lea.vmem %s0, %s181
        %p183 = pneg %p56
        %p184 = pneg %p53
        %p185 = pneg %p77
        %p186 = pneg %p74
        %p187 = pneg %p105
        %p188 = pneg %p102
        %s189 = sand.u32 %s92, 1
        %s190 = scalar_lea.sflag [#allocation3], %s189
        %s191 = sand.u32 %s92, 1
        %s192 = smul.addr %s191, 64
        %s193 = scalar_lea.vmem [#allocation2], %s192
        %p194 = pneg %p133
        %p195 = pneg %p130
        %s196 = sand.u32 %s120, 1
        %s197 = scalar_lea.sflag [#allocation5], %s196
        %s198 = sand.u32 %s120, 1
        %s199 = smul.addr %s198, 2
        %s200 = scalar_lea.vmem [#allocation4], %s199
        %p201 = scmp.lt.s32.totalorder %s25, 1
        %s202 = scalar_select %p201, %s25, 1
        %p203 = scmp.lt.s32.totalorder %s26, 1
        %s204 = scalar_select %p203, %s26, 1
        %s205 = smul.addr %s204, 20
        %s206 = smul.addr %s202, 40
        %s207 = sadd.s32 %s205, %s206
        %s208 = smul.addr %s207, 4
        %s209 = scalar_lea.vmem %s0, %s208
        %s210 = smul.u32 16, %s26
        %v212 = vld [vmem:[%s209] sm:$0xf]
        %v213 = vld [vmem:[%s209 + $0x4] sm:$0xf]
        %v214 = vld [vmem:[%s209 + $0x8] sm:$0xf]
        %v215 = vld [vmem:[%s209 + $0xc] sm:$0xf]
        %v216 = vld [vmem:[%s209 + $0x10] sm:$0xf]
        %v217 = vld [vmem:[%s209 + $0x14] sm:$0xf]
        %v218 = vld [vmem:[%s209 + $0x18] sm:$0xf]
        %v219 = vld [vmem:[%s209 + $0x1c] sm:$0xf]
        %v220 = vld [vmem:[%s209 + $0x20] sm:$0xf]
        %v221 = vld [vmem:[%s209 + $0x24] sm:$0xf]
        %v222 = vld [vmem:[%s209 + $0x28] sm:$0xf]
        %v223 = vld [vmem:[%s209 + $0x2c] sm:$0xf]
        %v224 = vld [vmem:[%s209 + $0x30] sm:$0xf]
        %v225 = vld [vmem:[%s209 + $0x34] sm:$0xf]
        %v226 = vld [vmem:[%s209 + $0x38] sm:$0xf]
        %v227 = vld [vmem:[%s209 + $0x3c] sm:$0xf]
        %v228 = vld [vmem:[%s209 + $0x40] sm:$0xf]
        %v229 = vld [vmem:[%s209 + $0x44] sm:$0xf]
        %v230 = vld [vmem:[%s209 + $0x48] sm:$0xf]
        %v231 = vld [vmem:[%s209 + $0x4c] sm:$0xf]
        %v232 = vld [vmem:[%s1] sm:$0xf]
        %v233 = vld [vmem:[%s1 + $0x4] sm:$0x3]
        %v234 = vld [vmem:[%s1 + $0x8] sm:$0xf]
        %v235 = vld [vmem:[%s1 + $0xc] sm:$0x3]
        %v236 = vld [vmem:[%s1 + $0x10] sm:$0xf]
        %v237 = vld [vmem:[%s1 + $0x14] sm:$0x3]
        %v254 = vunpack.c.l.b16 %v214
        %v255 = vunpack.c.l.b16 %v215
        %v256 = vunpack.c.l.b16 %v216
        %v257 = vunpack.c.l.b16 %v217
        %v258 = vunpack.c.l.b16 %v218
        %v259 = vunpack.c.l.b16 %v219
        %v260 = vunpack.c.l.b16 %v220
        %v261 = vunpack.c.l.b16 %v221
        %v262 = vunpack.c.l.b16 %v222
        %v263 = vunpack.c.l.b16 %v223
        %v264 = vunpack.c.l.b16 %v224
        %v265 = vunpack.c.l.b16 %v225
        %v266 = vunpack.c.l.b16 %v226
        %v267 = vunpack.c.l.b16 %v227
        %v268 = vunpack.c.l.b16 %v228
        %v269 = vunpack.c.l.b16 %v229
        %v270 = vpack.c.b16 %v255, %v254
        %v271 = vpack.c.b16 %v257, %v256
        %v272 = vpack.c.b16 %v259, %v258
        %v273 = vpack.c.b16 %v261, %v260
        %v274 = vpack.c.b16 %v263, %v262
        %v275 = vpack.c.b16 %v265, %v264
        %v276 = vpack.c.b16 %v267, %v266
        %v277 = vpack.c.b16 %v269, %v268
        %v280 = vunpack.c.l.b16 %v234
        %v281 = vunpack.c.l.b16 %v235
        %v282 = vpack.c.b16 %v281, %v280
        %vm283 = vcmask 97280
        %v285 = vsel %vm283, %v270, 0
        %v288 = vsel %vm283, %v271, 0
        %v291 = vsel %vm283, %v272, 0
        %v294 = vsel %vm283, %v273, 0
        %v297 = vsel %vm283, %v274, 0
        %v300 = vsel %vm283, %v275, 0
        %v303 = vsel %vm283, %v276, 0
        %v306 = vsel %vm283, %v277, 0
        %vm308 = vcmask 1045504
        %v310 = vsel %vm308, %v282, 0
        %312 = vmatprep.subr.bf16.mxu0 0
        %313 = vmatpush1.bf16.msra.mxu0 %v310
        %314 = vmatprep.subr.bf16.mxu0 0
        %315 = vmatpush1.bf16.msra.mxu0 0
        %316 = vmatprep.subr.bf16.mxu0 0
        %317 = vmatpush1.bf16.msra.mxu0 0
        %318 = vmatprep.subr.bf16.mxu0 0
        %319 = vmatpush1.bf16.msra.mxu0 0
        %320 = vmatprep.subr.bf16.mxu0 0
        %321 = vmatpush1.bf16.msra.mxu0 0
        %322 = vmatprep.subr.bf16.mxu0 0
        %323 = vmatpush1.bf16.msra.mxu0 0
        %324 = vmatprep.subr.bf16.mxu0 0
        %325 = vmatpush1.bf16.msra.mxu0 0
        %326 = vmatprep.subr.bf16.mxu0 0
        %327 = vmatpush1.bf16.msra.mxu0 0
        %328 = vmatprep.subr.bf16.mxu0 0
        %329 = vmatpush1.bf16.msra.mxu0 0
        %330 = vmatprep.subr.bf16.mxu0 0
        %331 = vmatpush1.bf16.msra.mxu0 0
        %332 = vmatprep.subr.bf16.mxu0 0
        %333 = vmatpush1.bf16.msra.mxu0 0
        %334 = vmatprep.subr.bf16.mxu0 0
        %335 = vmatpush1.bf16.msra.mxu0 0
        %336 = vmatprep.subr.bf16.mxu0 0
        %337 = vmatpush1.bf16.msra.mxu0 0
        %338 = vmatprep.subr.bf16.mxu0 0
        %339 = vmatpush1.bf16.msra.mxu0 0
        %340 = vmatprep.subr.bf16.mxu0 0
        %341 = vmatpush1.bf16.msra.mxu0 0
        %342 = vmatprep.subr.bf16.mxu0 0
        %343 = vmatpush1.bf16.msra.mxu0 0
        %344 = vmatprep.mubr.bf16.mxu0 0
        %345 = vmatmul.mubr.bf16.gmra.mrb[0].mxu0 %v285
        %v346 = vpop.f32.mrb[0].mxu0
        %v347 = vadd.f32 0.0, %v346
        %v348 = vpop.f32.mrb[0].mxu0
        %v349 = vpop.f32.mrb[0].mxu0
        %v350 = vadd.f32 0.0, %v349
        %v351 = vpop.f32.mrb[0].mxu0
        %352 = vmatprep.mubr.bf16.mxu0 0
        %353 = vmatmul.mubr.bf16.gmra.mrb[0].mxu0 %v288
        %v354 = vpop.f32.mrb[0].mxu0
        %v355 = vadd.f32 0.0, %v354
        %v356 = vpop.f32.mrb[0].mxu0
        %v357 = vpop.f32.mrb[0].mxu0
        %v358 = vadd.f32 0.0, %v357
        %v359 = vpop.f32.mrb[0].mxu0
        %360 = vmatprep.mubr.bf16.mxu0 0
        %361 = vmatmul.mubr.bf16.gmra.mrb[0].mxu0 %v291
        %v362 = vpop.f32.mrb[0].mxu0
        %v363 = vadd.f32 0.0, %v362
        %v364 = vpop.f32.mrb[0].mxu0
        %v365 = vpop.f32.mrb[0].mxu0
        %v366 = vadd.f32 0.0, %v365
        %v367 = vpop.f32.mrb[0].mxu0
        %368 = vmatprep.mubr.bf16.mxu0 0
        %369 = vmatmul.mubr.bf16.gmra.mrb[0].mxu0 %v294
        %v370 = vpop.f32.mrb[0].mxu0
        %v371 = vadd.f32 0.0, %v370
        %v372 = vpop.f32.mrb[0].mxu0
        %v373 = vpop.f32.mrb[0].mxu0
        %v374 = vadd.f32 0.0, %v373
        %v375 = vpop.f32.mrb[0].mxu0
        %376 = vmatprep.mubr.bf16.mxu0 0
        %377 = vmatmul.mubr.bf16.gmra.mrb[0].mxu0 %v297
        %v378 = vpop.f32.mrb[0].mxu0
        %v379 = vadd.f32 0.0, %v378
        %v380 = vpop.f32.mrb[0].mxu0
        %v381 = vpop.f32.mrb[0].mxu0
        %v382 = vadd.f32 0.0, %v381
        %v383 = vpop.f32.mrb[0].mxu0
        %384 = vmatprep.mubr.bf16.mxu0 0
        %385 = vmatmul.mubr.bf16.gmra.mrb[0].mxu0 %v300
        %v386 = vpop.f32.mrb[0].mxu0
        %v387 = vadd.f32 0.0, %v386
        %v388 = vpop.f32.mrb[0].mxu0
        %v389 = vpop.f32.mrb[0].mxu0
        %v390 = vadd.f32 0.0, %v389
        %v391 = vpop.f32.mrb[0].mxu0
        %392 = vmatprep.mubr.bf16.mxu0 0
        %393 = vmatmul.mubr.bf16.gmra.mrb[0].mxu0 %v303
        %v394 = vpop.f32.mrb[0].mxu0
        %v395 = vadd.f32 0.0, %v394
        %v396 = vpop.f32.mrb[0].mxu0
        %v397 = vpop.f32.mrb[0].mxu0
        %v398 = vadd.f32 0.0, %v397
        %v399 = vpop.f32.mrb[0].mxu0
        %400 = vmatprep.mubr.bf16.mxu0 0
        %401 = vmatmul.mubr.bf16.gmra.mrb[0].mxu0 %v306
        %v402 = vpop.f32.mrb[0].mxu0
        %v403 = vadd.f32 0.0, %v402
        %v404 = vpop.f32.mrb[0].mxu0
        %v405 = vpop.f32.mrb[0].mxu0
        %v406 = vadd.f32 0.0, %v405
        %v407 = vpop.f32.mrb[0].mxu0
        %408 = vdwg.mxu0
        %v411 = vunpack.c.l.b16 %v212
        %v412 = vunpack.c.l.b16 %v213
        %v413 = vpack.c.b16 %v412, %v411
        %v416 = vunpack.c.l.b16 %v232
        %v417 = vunpack.c.l.b16 %v233
        %v418 = vpack.c.b16 %v417, %v416
        %v420 = vsel %vm283, %v413, 0
        %v423 = vsel %vm308, %v418, 0
        %425 = vmatprep.subr.bf16.mxu0 0
        %426 = vmatpush1.bf16.msra.mxu0 %v423
        %427 = vmatprep.subr.bf16.mxu0 0
        %428 = vmatpush1.bf16.msra.mxu0 0
        %429 = vmatprep.subr.bf16.mxu0 0
        %430 = vmatpush1.bf16.msra.mxu0 0
        %431 = vmatprep.subr.bf16.mxu0 0
        %432 = vmatpush1.bf16.msra.mxu0 0
        %433 = vmatprep.subr.bf16.mxu0 0
        %434 = vmatpush1.bf16.msra.mxu0 0
        %435 = vmatprep.subr.bf16.mxu0 0
        %436 = vmatpush1.bf16.msra.mxu0 0
        %437 = vmatprep.subr.bf16.mxu0 0
        %438 = vmatpush1.bf16.msra.mxu0 0
        %439 = vmatprep.subr.bf16.mxu0 0
        %440 = vmatpush1.bf16.msra.mxu0 0
        %441 = vmatprep.subr.bf16.mxu0 0
        %442 = vmatpush1.bf16.msra.mxu0 0
        %443 = vmatprep.subr.bf16.mxu0 0
        %444 = vmatpush1.bf16.msra.mxu0 0
        %445 = vmatprep.subr.bf16.mxu0 0
        %446 = vmatpush1.bf16.msra.mxu0 0
        %447 = vmatprep.subr.bf16.mxu0 0
        %448 = vmatpush1.bf16.msra.mxu0 0
        %449 = vmatprep.subr.bf16.mxu0 0
        %450 = vmatpush1.bf16.msra.mxu0 0
        %451 = vmatprep.subr.bf16.mxu0 0
        %452 = vmatpush1.bf16.msra.mxu0 0
        %453 = vmatprep.subr.bf16.mxu0 0
        %454 = vmatpush1.bf16.msra.mxu0 0
        %455 = vmatprep.subr.bf16.mxu0 0
        %456 = vmatpush1.bf16.msra.mxu0 0
        %457 = vmatprep.mubr.bf16.mxu0 0
        %458 = vmatmul.mubr.bf16.gmra.mrb[0].mxu0 %v420
        %v459 = vpop.f32.mrb[0].mxu0
        %v460 = vadd.f32 %v347, %v459
        %v461 = vpop.f32.mrb[0].mxu0
        %v462 = vpop.f32.mrb[0].mxu0
        %v463 = vadd.f32 %v350, %v462
        %v464 = vpop.f32.mrb[0].mxu0
        %465 = vmatprep.mubr.bf16.mxu0 0
        %466 = vmatmul.mubr.bf16.gmra.mrb[0].mxu0 %v285
        %v467 = vpop.f32.mrb[0].mxu0
        %v468 = vadd.f32 %v355, %v467
        %v469 = vpop.f32.mrb[0].mxu0
        %v470 = vpop.f32.mrb[0].mxu0
        %v471 = vadd.f32 %v358, %v470
        %v472 = vpop.f32.mrb[0].mxu0
        %473 = vmatprep.mubr.bf16.mxu0 0
        %474 = vmatmul.mubr.bf16.gmra.mrb[0].mxu0 %v288
        %v475 = vpop.f32.mrb[0].mxu0
        %v476 = vadd.f32 %v363, %v475
        %v477 = vpop.f32.mrb[0].mxu0
        %v478 = vpop.f32.mrb[0].mxu0
        %v479 = vadd.f32 %v366, %v478
        %v480 = vpop.f32.mrb[0].mxu0
        %481 = vmatprep.mubr.bf16.mxu0 0
        %482 = vmatmul.mubr.bf16.gmra.mrb[0].mxu0 %v291
        %v483 = vpop.f32.mrb[0].mxu0
        %v484 = vadd.f32 %v371, %v483
        %v485 = vpop.f32.mrb[0].mxu0
        %v486 = vpop.f32.mrb[0].mxu0
        %v487 = vadd.f32 %v374, %v486
        %v488 = vpop.f32.mrb[0].mxu0
        %489 = vmatprep.mubr.bf16.mxu0 0
        %490 = vmatmul.mubr.bf16.gmra.mrb[0].mxu0 %v294
        %v491 = vpop.f32.mrb[0].mxu0
        %v492 = vadd.f32 %v379, %v491
        %v493 = vpop.f32.mrb[0].mxu0
        %v494 = vpop.f32.mrb[0].mxu0
        %v495 = vadd.f32 %v382, %v494
        %v496 = vpop.f32.mrb[0].mxu0
        %497 = vmatprep.mubr.bf16.mxu0 0
        %498 = vmatmul.mubr.bf16.gmra.mrb[0].mxu0 %v297
        %v499 = vpop.f32.mrb[0].mxu0
        %v500 = vadd.f32 %v387, %v499
        %v501 = vpop.f32.mrb[0].mxu0
        %v502 = vpop.f32.mrb[0].mxu0
        %v503 = vadd.f32 %v390, %v502
        %v504 = vpop.f32.mrb[0].mxu0
        %505 = vmatprep.mubr.bf16.mxu0 0
        %506 = vmatmul.mubr.bf16.gmra.mrb[0].mxu0 %v300
        %v507 = vpop.f32.mrb[0].mxu0
        %v508 = vadd.f32 %v395, %v507
        %v509 = vpop.f32.mrb[0].mxu0
        %v510 = vpop.f32.mrb[0].mxu0
        %v511 = vadd.f32 %v398, %v510
        %v512 = vpop.f32.mrb[0].mxu0
        %513 = vmatprep.mubr.bf16.mxu0 0
        %514 = vmatmul.mubr.bf16.gmra.mrb[0].mxu0 %v303
        %v515 = vpop.f32.mrb[0].mxu0
        %v516 = vadd.f32 %v403, %v515
        %v517 = vpop.f32.mrb[0].mxu0
        %v518 = vpop.f32.mrb[0].mxu0
        %v519 = vadd.f32 %v406, %v518
        %v520 = vpop.f32.mrb[0].mxu0
        %521 = vdwg.mxu0
        %v524 = vunpack.c.l.b16 %v230
        %v525 = vunpack.c.l.b16 %v231
        %v526 = vpack.c.b16 %v525, %v524
        %v529 = vunpack.c.l.b16 %v236
        %v530 = vunpack.c.l.b16 %v237
        %v531 = vpack.c.b16 %v530, %v529
        %v533 = vsel %vm283, %v526, 0
        %v536 = vsel %vm308, %v531, 0
        %538 = vmatprep.subr.bf16.mxu0 0
        %539 = vmatpush1.bf16.msra.mxu0 %v536
        %540 = vmatprep.subr.bf16.mxu0 0
        %541 = vmatpush1.bf16.msra.mxu0 0
        %542 = vmatprep.subr.bf16.mxu0 0
        %543 = vmatpush1.bf16.msra.mxu0 0
        %544 = vmatprep.subr.bf16.mxu0 0
        %545 = vmatpush1.bf16.msra.mxu0 0
        %546 = vmatprep.subr.bf16.mxu0 0
        %547 = vmatpush1.bf16.msra.mxu0 0
        %548 = vmatprep.subr.bf16.mxu0 0
        %549 = vmatpush1.bf16.msra.mxu0 0
        %550 = vmatprep.subr.bf16.mxu0 0
        %551 = vmatpush1.bf16.msra.mxu0 0
        %552 = vmatprep.subr.bf16.mxu0 0
        %553 = vmatpush1.bf16.msra.mxu0 0
        %554 = vmatprep.subr.bf16.mxu0 0
        %555 = vmatpush1.bf16.msra.mxu0 0
        %556 = vmatprep.subr.bf16.mxu0 0
        %557 = vmatpush1.bf16.msra.mxu0 0
        %558 = vmatprep.subr.bf16.mxu0 0
        %559 = vmatpush1.bf16.msra.mxu0 0
        %560 = vmatprep.subr.bf16.mxu0 0
        %561 = vmatpush1.bf16.msra.mxu0 0
        %562 = vmatprep.subr.bf16.mxu0 0
        %563 = vmatpush1.bf16.msra.mxu0 0
        %564 = vmatprep.subr.bf16.mxu0 0
        %565 = vmatpush1.bf16.msra.mxu0 0
        %566 = vmatprep.subr.bf16.mxu0 0
        %567 = vmatpush1.bf16.msra.mxu0 0
        %568 = vmatprep.subr.bf16.mxu0 0
        %569 = vmatpush1.bf16.msra.mxu0 0
        %570 = vmatprep.mubr.bf16.mxu0 0
        %571 = vmatmul.mubr.bf16.gmra.mrb[0].mxu0 %v288
        %v572 = vpop.f32.mrb[0].mxu0
        %v573 = vadd.f32 0.0, %v572
        %v574 = vpop.f32.mrb[0].mxu0
        %v575 = vpop.f32.mrb[0].mxu0
        %v576 = vadd.f32 0.0, %v575
        %v577 = vpop.f32.mrb[0].mxu0
        %578 = vmatprep.mubr.bf16.mxu0 0
        %579 = vmatmul.mubr.bf16.gmra.mrb[0].mxu0 %v291
        %v580 = vpop.f32.mrb[0].mxu0
        %v581 = vadd.f32 0.0, %v580
        %v582 = vpop.f32.mrb[0].mxu0
        %v583 = vpop.f32.mrb[0].mxu0
        %v584 = vadd.f32 0.0, %v583
        %v585 = vpop.f32.mrb[0].mxu0
        %586 = vmatprep.mubr.bf16.mxu0 0
        %587 = vmatmul.mubr.bf16.gmra.mrb[0].mxu0 %v294
        %v588 = vpop.f32.mrb[0].mxu0
        %v589 = vadd.f32 0.0, %v588
        %v590 = vpop.f32.mrb[0].mxu0
        %v591 = vpop.f32.mrb[0].mxu0
        %v592 = vadd.f32 0.0, %v591
        %v593 = vpop.f32.mrb[0].mxu0
        %594 = vmatprep.mubr.bf16.mxu0 0
        %595 = vmatmul.mubr.bf16.gmra.mrb[0].mxu0 %v297
        %v596 = vpop.f32.mrb[0].mxu0
        %v597 = vadd.f32 0.0, %v596
        %v598 = vpop.f32.mrb[0].mxu0
        %v599 = vpop.f32.mrb[0].mxu0
        %v600 = vadd.f32 0.0, %v599
        %v601 = vpop.f32.mrb[0].mxu0
        %602 = vmatprep.mubr.bf16.mxu0 0
        %603 = vmatmul.mubr.bf16.gmra.mrb[0].mxu0 %v300
        %v604 = vpop.f32.mrb[0].mxu0
        %v605 = vadd.f32 0.0, %v604
        %v606 = vpop.f32.mrb[0].mxu0
        %v607 = vpop.f32.mrb[0].mxu0
        %v608 = vadd.f32 0.0, %v607
        %v609 = vpop.f32.mrb[0].mxu0
        %610 = vmatprep.mubr.bf16.mxu0 0
        %611 = vmatmul.mubr.bf16.gmra.mrb[0].mxu0 %v303
        %v612 = vpop.f32.mrb[0].mxu0
        %v613 = vadd.f32 0.0, %v612
        %v614 = vpop.f32.mrb[0].mxu0
        %v615 = vpop.f32.mrb[0].mxu0
        %v616 = vadd.f32 0.0, %v615
        %v617 = vpop.f32.mrb[0].mxu0
        %618 = vmatprep.mubr.bf16.mxu0 0
        %619 = vmatmul.mubr.bf16.gmra.mrb[0].mxu0 %v306
        %v620 = vpop.f32.mrb[0].mxu0
        %v621 = vadd.f32 0.0, %v620
        %v622 = vpop.f32.mrb[0].mxu0
        %v623 = vpop.f32.mrb[0].mxu0
        %v624 = vadd.f32 0.0, %v623
        %v625 = vpop.f32.mrb[0].mxu0
        %626 = vmatprep.mubr.bf16.mxu0 0
        %627 = vmatmul.mubr.bf16.gmra.mrb[0].mxu0 %v533
        %v628 = vpop.f32.mrb[0].mxu0
        %v629 = vadd.f32 0.0, %v628
        %v630 = vpop.f32.mrb[0].mxu0
        %v631 = vpop.f32.mrb[0].mxu0
        %v632 = vadd.f32 0.0, %v631
        %v633 = vpop.f32.mrb[0].mxu0
        %634 = vdwg.mxu0
        %v635 = vadd.f32 %v460, %v573
        %v636 = vadd.f32 %v463, %v576
        %v637 = vadd.f32 %v468, %v581
        %v638 = vadd.f32 %v471, %v584
        %v639 = vadd.f32 %v476, %v589
        %v640 = vadd.f32 %v479, %v592
        %v641 = vadd.f32 %v484, %v597
        %v642 = vadd.f32 %v487, %v600
        %v643 = vadd.f32 %v492, %v605
        %v644 = vadd.f32 %v495, %v608
        %v645 = vadd.f32 %v500, %v613
        %v646 = vadd.f32 %v503, %v616
        %v647 = vadd.f32 %v508, %v621
        %v648 = vadd.f32 %v511, %v624
        %v649 = vadd.f32 %v516, %v629
        %v650 = vadd.f32 %v519, %v632
        %v651 = vpack.c.bf16 %v636, %v635
        %v652 = vpack.c.bf16 %v638, %v637
        %v653 = vpack.c.bf16 %v640, %v639
        %v654 = vpack.c.bf16 %v642, %v641
        %v655 = vpack.c.bf16 %v644, %v643
        %v656 = vpack.c.bf16 %v646, %v645
        %v657 = vpack.c.bf16 %v648, %v647
        %v658 = vpack.c.bf16 %v650, %v649
        %v667 = vunpack.c.l.b16 %v651
        %v668 = vunpack.c.h.b16 %v651
        %v669 = vunpack.c.l.b16 %v652
        %v670 = vunpack.c.h.b16 %v652
        %v671 = vunpack.c.l.b16 %v653
        %v672 = vunpack.c.h.b16 %v653
        %v673 = vunpack.c.l.b16 %v654
        %v674 = vunpack.c.h.b16 %v654
        %v675 = vunpack.c.l.b16 %v655
        %v676 = vunpack.c.h.b16 %v655
        %v677 = vunpack.c.l.b16 %v656
        %v678 = vunpack.c.h.b16 %v656
        %v679 = vunpack.c.l.b16 %v657
        %v680 = vunpack.c.h.b16 %v657
        %v681 = vunpack.c.l.b16 %v658
        %v682 = vunpack.c.h.b16 %v658
        %v683 = vpack.c.b16 %v667, %v667
        %v684 = vpack.c.b16 %v668, %v668
        %v685 = vpack.c.b16 %v669, %v669
        %v686 = vpack.c.b16 %v670, %v670
        %v687 = vpack.c.b16 %v671, %v671
        %v688 = vpack.c.b16 %v672, %v672
        %v689 = vpack.c.b16 %v673, %v673
        %v690 = vpack.c.b16 %v674, %v674
        %v691 = vpack.c.b16 %v675, %v675
        %v692 = vpack.c.b16 %v676, %v676
        %v693 = vpack.c.b16 %v677, %v677
        %v694 = vpack.c.b16 %v678, %v678
        %v695 = vpack.c.b16 %v679, %v679
        %v696 = vpack.c.b16 %v680, %v680
        %v697 = vpack.c.b16 %v681, %v681
        %v698 = vpack.c.b16 %v682, %v682
        %715 = vst [vmem:[%s193] sm:$0xf] %v683
        %716 = vst [vmem:[%s193 + $0x4] sm:$0xf] %v684
        %717 = vst [vmem:[%s193 + $0x8] sm:$0xf] %v685
        %718 = vst [vmem:[%s193 + $0xc] sm:$0xf] %v686
        %719 = vst [vmem:[%s193 + $0x10] sm:$0xf] %v687
        %720 = vst [vmem:[%s193 + $0x14] sm:$0xf] %v688
        %721 = vst [vmem:[%s193 + $0x18] sm:$0xf] %v689
        %722 = vst [vmem:[%s193 + $0x1c] sm:$0xf] %v690
        %723 = vst [vmem:[%s193 + $0x20] sm:$0xf] %v691
        %724 = vst [vmem:[%s193 + $0x24] sm:$0xf] %v692
        %725 = vst [vmem:[%s193 + $0x28] sm:$0xf] %v693
        %726 = vst [vmem:[%s193 + $0x2c] sm:$0xf] %v694
        %727 = vst [vmem:[%s193 + $0x30] sm:$0xf] %v695
        %728 = vst [vmem:[%s193 + $0x34] sm:$0xf] %v696
        %729 = vst [vmem:[%s193 + $0x38] sm:$0xf] %v697
        %730 = vst [vmem:[%s193 + $0x3c] sm:$0xf] %v698
        %v731 = vadd.f32 %v635, %v636
        %v732 = vadd.f32 %v731, %v637
        %v733 = vadd.f32 %v732, %v638
        %v734 = vadd.f32 %v733, %v639
        %v735 = vadd.f32 %v734, %v640
        %v736 = vadd.f32 %v735, %v641
        %v737 = vadd.f32 %v736, %v642
        %v738 = vadd.f32 %v737, %v643
        %v739 = vadd.f32 %v738, %v644
        %v740 = vadd.f32 %v739, %v645
        %v741 = vadd.f32 %v740, %v646
        %v742 = vadd.f32 %v741, %v647
        %v743 = vadd.f32 %v742, %v648
        %v744 = vadd.f32 %v743, %v649
        %v745 = vadd.f32 %v744, %v650
        %v746 = vrot.slane %v745, 4
        %v747 = vadd.f32 %v745, %v746
        %v748 = vrot.slane %v747, 2
        %v749 = vadd.f32 %v747, %v748
        %v750 = vrot.slane %v749, 1
        %v751 = vadd.f32 %v749, %v750
        %752 = vst [vmem:[%s200] sm:$0x1] %v751
        %v753 = vmul.f32 %v635, %v635
        %v754 = vmul.f32 %v636, %v636
        %v755 = vmul.f32 %v637, %v637
        %v756 = vmul.f32 %v638, %v638
        %v757 = vmul.f32 %v639, %v639
        %v758 = vmul.f32 %v640, %v640
        %v759 = vmul.f32 %v641, %v641
        %v760 = vmul.f32 %v642, %v642
        %v761 = vmul.f32 %v643, %v643
        %v762 = vmul.f32 %v644, %v644
        %v763 = vmul.f32 %v645, %v645
        %v764 = vmul.f32 %v646, %v646
        %v765 = vmul.f32 %v647, %v647
        %v766 = vmul.f32 %v648, %v648
        %v767 = vmul.f32 %v649, %v649
        %v768 = vmul.f32 %v650, %v650
        %v769 = vadd.f32 %v753, %v754
        %v770 = vadd.f32 %v769, %v755
        %v771 = vadd.f32 %v770, %v756
        %v772 = vadd.f32 %v771, %v757
        %v773 = vadd.f32 %v772, %v758
        %v774 = vadd.f32 %v773, %v759
        %v775 = vadd.f32 %v774, %v760
        %v776 = vadd.f32 %v775, %v761
        %v777 = vadd.f32 %v776, %v762
        %v778 = vadd.f32 %v777, %v763
        %v779 = vadd.f32 %v778, %v764
        %v780 = vadd.f32 %v779, %v765
        %v781 = vadd.f32 %v780, %v766
        %v782 = vadd.f32 %v781, %v767
        %v783 = vadd.f32 %v782, %v768
        %v784 = vrot.slane %v783, 4
        %v785 = vadd.f32 %v783, %v784
        %v786 = vrot.slane %v785, 2
        %v787 = vadd.f32 %v785, %v786
        %v788 = vrot.slane %v787, 1
        %v789 = vadd.f32 %v787, %v788
        %790 = vst [vmem:[%s200 + $0x1] sm:$0x1] %v789
        %s791 = sand.u32 %s92, 1
        %s792 = scalar_lea.sflag [#allocation3], %s791
        %s793 = sand.u32 %s92, 1
        %s794 = smul.addr %s793, 64
        %s795 = scalar_lea.vmem [#allocation2], %s794
        %s796 = sand.u32 %s120, 1
        %s797 = scalar_lea.sflag [#allocation5], %s796
        %s798 = sand.u32 %s120, 1
        %s799 = smul.addr %s798, 2
        %s800 = scalar_lea.vmem [#allocation4], %s799
        // Predicated region
        $region29: #{tpu_custom_call.1} parent=27 // pred_check
          %p801 = pneg %p102
        $region30: #{tpu_custom_call.1} parent=27 // pred_check_branch
          %803 = sbr.rel (%p801) target = $region32
        $region31: #{tpu_custom_call.1} parent=27 // pred_region
          %s804 = smul.u32 16, %s26
          %s806 = ssub.s32 1024, 1024
          %807 = vsyncadd %s792, %s806
          %s808 = smul.addr %s25, 32
          %s809 = sadd.s32 %s804, %s808
          %s810 = smul.addr %s809, 64
          %s811 = scalar_lea.hbm %s2, %s810
          %s812 = sshll.u32 %s795, 4
          %s813 = int_to_ptr.vmem [resolvable:$true] %s812
          %818 = dma.vmem_to_hbm [thread:$0]  %s813, 1024, %s811, %s792, 64, 64, 4
        $region32: #{tpu_custom_call.1} parent=27 // pred_fallthru
          _
        // Predicated region
        $region33: #{tpu_custom_call.1} parent=27 // pred_check
          %p819 = pneg %p130
        $region34: #{tpu_custom_call.1} parent=27 // pred_check_branch
          %821 = sbr.rel (%p819) target = $region36
        $region35: #{tpu_custom_call.1} parent=27 // pred_region
          %s823 = ssub.s32 32, 32
          %824 = vsyncadd %s797, %s823
          %s825 = smul.addr %s25, 2
          %s826 = sadd.s32 %s26, %s825
          %s827 = smul.addr %s826, 32
          %s828 = scalar_lea.hbm %s3, %s827
          %s830 = sshll.u32 %s800, 4
          %s831 = int_to_ptr.vmem [resolvable:$true] %s830
          %833 = dma.vmem_to_hbm [thread:$0]  %s831, 32, %s828, %s797
        $region36: #{tpu_custom_call.1} parent=27 // pred_fallthru
          _
      $region28: #{tpu_custom_call.1} parent=5 // pred_fallthru
        _
      %p834 = scmp.le.s32.totalorder 2, %s16
      // Predicated region
      $region37: #{tpu_custom_call.1} parent=5 // pred_check
        %p835 = pneg %p834
      $region38: #{tpu_custom_call.1} parent=5 // pred_check_branch
        %837 = sbr.rel (%p835) target = $region40
      $region39: #{tpu_custom_call.1} parent=5 // pred_region
        %s838 = ssub.s32 %s16, 2
        // Predicated region
        $region41: #{tpu_custom_call.1} parent=39 // pred_check
          %p839 = pneg %p108
        $region42: #{tpu_custom_call.1} parent=39 // pred_check_branch
          %841 = sbr.rel (%p839) target = $region44
        $region43: #{tpu_custom_call.1} parent=39 // pred_region
          %s842 = sand.u32 %s93, 1
          %s843 = scalar_lea.sflag [#allocation3], %s842
          %s844 = sand.u32 %s93, 1
          %s845 = smul.addr %s844, 64
          %s846 = scalar_lea.vmem [#allocation2], %s845
          %847 = dma.done %s843, 1024
        $region44: #{tpu_custom_call.1} parent=39 // pred_fallthru
          _
        // Predicated region
        $region45: #{tpu_custom_call.1} parent=39 // pred_check
          %p848 = pneg %p136
        $region46: #{tpu_custom_call.1} parent=39 // pred_check_branch
          %850 = sbr.rel (%p848) target = $region48
        $region47: #{tpu_custom_call.1} parent=39 // pred_region
          %s851 = sand.u32 %s121, 1
          %s852 = scalar_lea.sflag [#allocation5], %s851
          %s853 = sand.u32 %s121, 1
          %s854 = smul.addr %s853, 2
          %s855 = scalar_lea.vmem [#allocation4], %s854
          %856 = dma.done %s852, 32
        $region48: #{tpu_custom_call.1} parent=39 // pred_fallthru
          _
      $region40: #{tpu_custom_call.1} parent=5 // pred_fallthru
        _
    $region6: #{tpu_custom_call.1} parent=1 // loop_footer
      %s20 = sadd.s32 1, %s16
    $region7: #{tpu_custom_call.1} parent=1 // loop_footer_branch
      %15 = sbr.rel target = $region3
    $region8: #{tpu_custom_call.1} parent=1 // loop_exit
      _
    %857 = vsyncpa [#allocation3], 1
    %s858 = scalar_lea.sflag [#allocation3], 1
    %859 = vsyncpa %s858, 1
    %860 = vsyncpa [#allocation5], 1
    %s861 = scalar_lea.sflag [#allocation5], 1
    %862 = vsyncpa %s861, 1

</llo_original>
